<compile_context>
chip_gen: v7x
topology: tpu7x:2x2x1
jax: 0.10.0
libtpu: 0.0.40
codegen_flags: <defaults>
</compile_context>

<pallas_src>
import jax
import jax.numpy as jnp
from jax.experimental import pallas as pl
from jax.experimental.pallas import tpu as pltpu

_LANE = 128


def _round_up(n, m):
    return ((n + m - 1) // m) * m


def decoder_kernel(x_ref, w1_ref, b1_ref, w2_ref, b2_ref, out_ref):
    # x_ref:  (bm, lat_p)       f32
    # w1_ref: (lat_p, hidden)   bf16   b1_ref: (1, hidden)  f32
    # w2_ref: (hidden, out_dim) bf16   b2_ref: (1, out_dim) f32
    # out_ref:(bm, out_dim)     f32 (or bf16 if requested)
    x = x_ref[...].astype(jnp.bfloat16)
    h = jnp.dot(x, w1_ref[...], preferred_element_type=jnp.float32) + b1_ref[...]
    h = jnp.maximum(h, 0.0)                                  # ReLU (f32)
    y = jnp.dot(h.astype(jnp.bfloat16), w2_ref[...],
                preferred_element_type=jnp.float32) + b2_ref[...]
    # sigmoid(y) == 0.5*tanh(0.5*y) + 0.5  (exact); tanh runs on the EUP slot.
    out_ref[...] = (0.5 * jnp.tanh(0.5 * y) + 0.5).astype(out_ref.dtype)


def _num_tensorcores():
    """2 TensorCores per chip on v7x, 1 on v5e/v6e."""
    try:
        kind = jax.devices()[0].device_kind.lower()
    except Exception:
        return 1
    return 2 if "v7" in kind else 1


def _plan_tiles(batch, num_cores):
    """Return (bm, padded_batch).

    Single-TC (v5e/v6e): the parallel axis buys nothing, so one big tile
    (<=1024 rows, 1 grid step) for small/medium batches, 512-row tiles beyond.
    Multi-TC (v7x): keep >= 2 grid steps with an EVEN step count so the
    'parallel' batch axis shards evenly across both cores, while keeping the
    batch-padding waste small.
    """
    if num_cores <= 1:
        if batch <= 1024:
            bm = _round_up(batch, 8)
            return bm, bm
        bm = 512
        return bm, _round_up(batch, bm)
    # v7x path.
    if batch <= 256:
        bm = _round_up(-(-batch // 2), 8)        # two equal tiles
        return bm, 2 * bm
    best = None
    for bm in (512, 256, 128):
        steps = max(2, -(-batch // bm))
        steps += steps % 2                        # even step count
        padded = bm * steps
        if (best is None or padded < best[1]
                or (padded == best[1] and bm > best[0])):
            best = (bm, padded)
    return best


def prepare_params(w1, b1, w2, b2):
    """One-time parameter prep, hoisted out of the per-call path.

    Weights are stored pre-transposed as (in_features, out_features).
    latent (matmul-1 K dim) is zero-padded to a lane multiple; weights are cast
    to bf16 for the MXU; biases stay f32 as (1, N) rows for lane broadcast.
    """
    latent, hidden = w1.shape
    out_dim = w2.shape[1]
    lat_p = max(_LANE, _round_up(latent, _LANE))

    w1 = jnp.asarray(w1, jnp.float32)
    if lat_p != latent:
        w1 = jnp.pad(w1, ((0, lat_p - latent), (0, 0)))

    return dict(
        latent=latent, lat_p=lat_p, hidden=hidden, out_dim=out_dim,
        w1=w1.astype(jnp.bfloat16),
        b1=jnp.asarray(b1, jnp.float32).reshape(1, hidden),
        w2=jnp.asarray(w2, jnp.float32).astype(jnp.bfloat16),
        b2=jnp.asarray(b2, jnp.float32).reshape(1, out_dim),
    )


def decoder_forward(x, params, *, bm=None, out_dtype=jnp.float32):
    """x: (B, latent_dim) float32 -> (B, 1, 28, 28) out_dtype."""
    B, latent = x.shape
    assert latent == params["latent"]
    lat_p = params["lat_p"]
    hidden = params["hidden"]
    out_dim = params["out_dim"]
    w1, b1, w2, b2 = params["w1"], params["b1"], params["w2"], params["b2"]

    x = jnp.asarray(x, jnp.float32)
    if lat_p != latent:
        x = jnp.pad(x, ((0, 0), (0, lat_p - latent)))   # zero cols -> exact

    if bm is None:
        bm, B_pad = _plan_tiles(B, _num_tensorcores())
    else:
        B_pad = _round_up(B, bm)
    if B_pad != B:
        x = jnp.pad(x, ((0, B_pad - B), (0, 0)))
    assert B_pad % bm == 0
    grid = (B_pad // bm,)

    # Grid-constant weight/bias blocks: single-buffered (no dead second buffer).
    def _const_spec(shape):
        return pl.BlockSpec(shape, lambda i: (0, 0), pipeline_mode=pl.Buffered(1))

    out_itemsize = jnp.dtype(out_dtype).itemsize
    flops = 2 * B_pad * (lat_p * hidden + hidden * out_dim)
    transcendentals = B_pad * out_dim                    # tanh per output elem
    bytes_accessed = (
        x.size * 4 + B_pad * out_dim * out_itemsize      # activations in/out
        + w1.size * 2 + w2.size * 2                      # bf16 weights
        + b1.size * 4 + b2.size * 4                      # f32 biases
    )

    out_flat = pl.pallas_call(
        decoder_kernel,
        out_shape=jax.ShapeDtypeStruct((B_pad, out_dim), out_dtype),
        grid_spec=pltpu.PrefetchScalarGridSpec(
            num_scalar_prefetch=0,
            grid=grid,
            in_specs=[
                pl.BlockSpec((bm, lat_p), lambda i: (i, 0)),   # x tile
                _const_spec((lat_p, hidden)),                  # W1 (full)
                _const_spec((1, hidden)),                      # b1 (full)
                _const_spec((hidden, out_dim)),                # W2 (full)
                _const_spec((1, out_dim)),                     # b2 (full)
            ],
            out_specs=pl.BlockSpec((bm, out_dim), lambda i: (i, 0)),
        ),
        compiler_params=pltpu.CompilerParams(
            dimension_semantics=("parallel",),
            vmem_limit_bytes=32 * 1024 * 1024,
        ),
        cost_estimate=pl.CostEstimate(
            flops=flops,
            transcendentals=transcendentals,
            bytes_accessed=bytes_accessed,
        ),
    )(x, w1, b1, w2, b2)

    # Row-slice only when the batch was padded (padded rows hold sigmoid(b2));
    # when B == B_pad the reshape is a free contiguous metadata reshape.
    if B_pad != B:
        out_flat = out_flat[:B]
    return out_flat.reshape((-1, 1, 28, 28))


def init_params(key, latent_dim):
    """Deterministic init mimicking torch.nn.Linear default U(-1/sqrt(fan_in), ...)."""
    k1, k2, k3, k4 = jax.random.split(key, 4)
    bound1 = 1.0 / jnp.sqrt(latent_dim)
    bound2 = 1.0 / jnp.sqrt(512.0)
    # stored pre-transposed: (in_features, out_features)
    w1 = jax.random.uniform(k1, (latent_dim, 512), jnp.float32, -bound1, bound1)
    b1 = jax.random.uniform(k2, (512,), jnp.float32, -bound1, bound1)
    w2 = jax.random.uniform(k3, (512, 784), jnp.float32, -bound2, bound2)
    b2 = jax.random.uniform(k4, (784,), jnp.float32, -bound2, bound2)
    return w1, b1, w2, b2


if __name__ == "__main__":
    latent_dim = 32
    batch = 16

    key = jax.random.PRNGKey(0)
    kx, kp = jax.random.split(key)
    x = jax.random.normal(kx, (batch, latent_dim), jnp.float32)
    w1, b1, w2, b2 = init_params(kp, latent_dim)

    params = prepare_params(w1, b1, w2, b2)   # one-time weight prep (hoisted)
    out = decoder_forward(x, params)
    out = jax.block_until_ready(out)

    # Pure-JAX f32 reference. Kernel uses bf16 MXU inputs with f32 accumulation,
    # so the tolerance is loosened accordingly.
    h_ref = jnp.maximum(x @ w1 + b1[None, :], 0.0)
    y_ref = jax.nn.sigmoid(h_ref @ w2 + b2[None, :]).reshape((-1, 1, 28, 28))
    assert out.shape == (batch, 1, 28, 28)
    max_err = float(jnp.max(jnp.abs(out - y_ref)))
    assert jnp.allclose(out, y_ref, atol=2e-2, rtol=0.0), max_err

    print("KERNEL_OK")
</pallas_src>

<mosaic_0001>
module attributes {stable_mosaic.version = 11 : i64} {
  func.func @decoder_kernel(%arg0: i32, %arg1: memref<16x128xf32, #tpu.memory_space<vmem>>, %arg2: memref<128x512xbf16, #tpu.memory_space<vmem>>, %arg3: memref<1x512xf32, #tpu.memory_space<vmem>>, %arg4: memref<512x784xbf16, #tpu.memory_space<vmem>>, %arg5: memref<1x784xf32, #tpu.memory_space<vmem>>, %arg6: memref<16x784xf32, #tpu.memory_space<vmem>>) attributes {dimension_semantics = [#tpu.dimension_semantics<parallel>], iteration_bounds = array<i64: 1>, scalar_prefetch = 0 : i64, scratch_operands = 0 : i64, tpu.core_type = #tpu.core_type<tc>, window_params = [{transform_indices = @transform_0, window_bounds = array<i64: 16, 128>}, {pipeline_mode = #tpu.pipeline_mode<synchronous>, transform_indices = @transform_1, window_bounds = array<i64: 128, 512>}, {pipeline_mode = #tpu.pipeline_mode<synchronous>, transform_indices = @transform_2, window_bounds = array<i64: 1, 512>}, {pipeline_mode = #tpu.pipeline_mode<synchronous>, transform_indices = @transform_3, window_bounds = array<i64: 512, 784>}, {pipeline_mode = #tpu.pipeline_mode<synchronous>, transform_indices = @transform_4, window_bounds = array<i64: 1, 784>}, {transform_indices = @transform_5, window_bounds = array<i64: 16, 784>}]} {
    %c0 = arith.constant 0 : index
    %c0_0 = arith.constant 0 : index
    %0 = vector.load %arg1[%c0, %c0_0] : memref<16x128xf32, #tpu.memory_space<vmem>>, vector<16x128xf32>
    %1 = arith.truncf %0 : vector<16x128xf32> to vector<16x128xbf16>
    %c0_1 = arith.constant 0 : index
    %c0_2 = arith.constant 0 : index
    %2 = vector.load %arg2[%c0_1, %c0_2] : memref<128x512xbf16, #tpu.memory_space<vmem>>, vector<128x512xbf16>
    %cst = arith.constant dense<0.000000e+00> : vector<16x512xf32>
    %3 = tpu.matmul %1, %2, %cst {dimension_numbers = #tpu.dot_dimension_numbers<[1], [0], [0], [1], [0, 0, 1, 1], [], []>} : vector<16x128xbf16>, vector<128x512xbf16>, vector<16x512xf32> -> vector<16x512xf32>
    %c0_3 = arith.constant 0 : index
    %c0_4 = arith.constant 0 : index
    %4 = vector.load %arg3[%c0_3, %c0_4] : memref<1x512xf32, #tpu.memory_space<vmem>>, vector<1x512xf32>
    %5 = vector.broadcast %4 : vector<1x512xf32> to vector<16x512xf32>
    %6 = arith.addf %3, %5 : vector<16x512xf32>
    %cst_5 = arith.constant 0.000000e+00 : f32
    %7 = vector.broadcast %cst_5 : f32 to vector<16x512xf32>
    %8 = arith.maximumf %6, %7 : vector<16x512xf32>
    %9 = arith.truncf %8 : vector<16x512xf32> to vector<16x512xbf16>
    %c0_6 = arith.constant 0 : index
    %c0_7 = arith.constant 0 : index
    %10 = vector.load %arg4[%c0_6, %c0_7] : memref<512x784xbf16, #tpu.memory_space<vmem>>, vector<512x784xbf16>
    %cst_8 = arith.constant dense<0.000000e+00> : vector<16x784xf32>
    %11 = tpu.matmul %9, %10, %cst_8 {dimension_numbers = #tpu.dot_dimension_numbers<[1], [0], [0], [1], [0, 0, 1, 1], [], []>} : vector<16x512xbf16>, vector<512x784xbf16>, vector<16x784xf32> -> vector<16x784xf32>
    %c0_9 = arith.constant 0 : index
    %c0_10 = arith.constant 0 : index
    %12 = vector.load %arg5[%c0_9, %c0_10] : memref<1x784xf32, #tpu.memory_space<vmem>>, vector<1x784xf32>
    %13 = vector.broadcast %12 : vector<1x784xf32> to vector<16x784xf32>
    %14 = arith.addf %11, %13 : vector<16x784xf32>
    %cst_11 = arith.constant 5.000000e-01 : f32
    %15 = vector.broadcast %cst_11 : f32 to vector<16x784xf32>
    %16 = arith.mulf %15, %14 : vector<16x784xf32>
    %17 = math.tanh %16 : vector<16x784xf32>
    %cst_12 = arith.constant 5.000000e-01 : f32
    %18 = vector.broadcast %cst_12 : f32 to vector<16x784xf32>
    %19 = arith.mulf %18, %17 : vector<16x784xf32>
    %cst_13 = arith.constant 5.000000e-01 : f32
    %20 = vector.broadcast %cst_13 : f32 to vector<16x784xf32>
    %21 = arith.addf %19, %20 : vector<16x784xf32>
    %c0_14 = arith.constant 0 : index
    %c0_15 = arith.constant 0 : index
    %22 = vector.load %arg6[%c0_14, %c0_15] : memref<16x784xf32, #tpu.memory_space<vmem>>, vector<16x784xf32>
    tpu.vector_store %arg6[%c0_14, %c0_15], %21 {strides = array<i32>} : memref<16x784xf32, #tpu.memory_space<vmem>>, vector<16x784xf32>,
    return
  }
  func.func @transform_0(%arg0: i32) -> (i32, i32) {
    %c0_i32 = arith.constant 0 : i32
    %c0_i32_0 = arith.constant 0 : i32
    return %arg0, %c0_i32 : i32, i32
  }
  func.func @transform_1(%arg0: i32) -> (i32, i32) {
    %c0_i32 = arith.constant 0 : i32
    %c0_i32_0 = arith.constant 0 : i32
    %c0_i32_1 = arith.constant 0 : i32
    return %c0_i32, %c0_i32_0 : i32, i32
  }
  func.func @transform_2(%arg0: i32) -> (i32, i32) {
    %c0_i32 = arith.constant 0 : i32
    %c0_i32_0 = arith.constant 0 : i32
    %c0_i32_1 = arith.constant 0 : i32
    return %c0_i32, %c0_i32_0 : i32, i32
  }
  func.func @transform_3(%arg0: i32) -> (i32, i32) {
    %c0_i32 = arith.constant 0 : i32
    %c0_i32_0 = arith.constant 0 : i32
    %c0_i32_1 = arith.constant 0 : i32
    return %c0_i32, %c0_i32_0 : i32, i32
  }
  func.func @transform_4(%arg0: i32) -> (i32, i32) {
    %c0_i32 = arith.constant 0 : i32
    %c0_i32_0 = arith.constant 0 : i32
    %c0_i32_1 = arith.constant 0 : i32
    return %c0_i32, %c0_i32_0 : i32, i32
  }
  func.func @transform_5(%arg0: i32) -> (i32, i32) {
    %c0_i32 = arith.constant 0 : i32
    %c0_i32_0 = arith.constant 0 : i32
    return %arg0, %c0_i32 : i32, i32
  }
}

</mosaic_0001>

<llo_original>
// kernel: tpu_custom_call.1
$region0: #{tpu_custom_call.1}
  #allocation0 [shape = 'u32[]', space=smem, size = 0x4, offset = 0x4, fixed_abs, tag = 'smem constant byte address 0x4 - core index']
  #allocation1 [shape = 'u32[144,128]{1,0:T(1,128)}', space=vmem, size = 0x12000, scoped, tag = 'internal scratch']
  %s0 = inlined_call_operand.vmem [shape: f32[16,128], index: 0, kind: input, shape index: {}]
  %s1 = inlined_call_operand.vmem [shape: bf16[128,512], index: 1, kind: input, shape index: {}]
  %s2 = inlined_call_operand.vmem [shape: f32[1,512], index: 2, kind: input, shape index: {}]
  %s3 = inlined_call_operand.vmem [shape: bf16[512,784], index: 3, kind: input, shape index: {}]
  %s4 = inlined_call_operand.vmem [shape: f32[1,784], index: 4, kind: input, shape index: {}]
  %s5 = inlined_call_operand.hbm [shape: f32[16,784], index: 5, kind: output, shape index: {}]
  %s6 = sld [smem:[#allocation0]]
  $region30: #{tpu_custom_call.1} parent=0
    _
  %s8 = ssub.s32 1, %s6
  %s9 = scalar_select 0, %s8, %s6
  $region1: #{tpu_custom_call.1} parent=0
    #allocation2 [shape = 'u8[57344]{0}', space=vmem, size = 0xe000, scoped, tag = 'output window, operand 0, single buffered']
    #allocation3 [shape = 's32[1]{0}', space=sflag, size = 0x4, scoped, tag = 'scoped memory for tpu_custom_call.1']
    %10 = vsyncpa [#allocation3], 0
    // Predicated region
    $region2: #{tpu_custom_call.1} parent=1 // pred_check
      _
    $region3: #{tpu_custom_call.1} parent=1 // pred_check_branch
      %12 = sbr.rel (0) target = $region5
    $region4: #{tpu_custom_call.1} parent=1 // pred_region
      _
    $region5: #{tpu_custom_call.1} parent=1 // pred_fallthru
      _
    // Predicated region
    $region6: #{tpu_custom_call.1} parent=1 // pred_check
      _
    $region7: #{tpu_custom_call.1} parent=1 // pred_check_branch
      %14 = sbr.rel (0) target = $region9
    $region8: #{tpu_custom_call.1} parent=1 // pred_region
      _
    $region9: #{tpu_custom_call.1} parent=1 // pred_fallthru
      _
    // Predicated region
    $region10: #{tpu_custom_call.1} parent=1 // pred_check
      _
    $region11: #{tpu_custom_call.1} parent=1 // pred_check_branch
      %16 = sbr.rel (0) target = $region13
    $region12: #{tpu_custom_call.1} parent=1 // pred_region
      _
    $region13: #{tpu_custom_call.1} parent=1 // pred_fallthru
      _
    // Predicated region
    $region14: #{tpu_custom_call.1} parent=1 // pred_check
      _
    $region15: #{tpu_custom_call.1} parent=1 // pred_check_branch
      %18 = sbr.rel (0) target = $region17
    $region16: #{tpu_custom_call.1} parent=1 // pred_region
      _
    $region17: #{tpu_custom_call.1} parent=1 // pred_fallthru
      _
    // Predicated region
    $region18: #{tpu_custom_call.1} parent=1 // pred_check
      _
    $region19: #{tpu_custom_call.1} parent=1 // pred_check_branch
      %20 = sbr.rel (0) target = $region21
    $region20: #{tpu_custom_call.1} parent=1 // pred_region
      _
    $region21: #{tpu_custom_call.1} parent=1 // pred_fallthru
      _
    %v22 = vld [vmem:[%s0] sm:$0xff]
    %v23 = vld [vmem:[%s0 + $0x8] sm:$0xff]
    %v24 = vpack.c.bf16 %v23, %v22
    %v25 = vld [vmem:[%s1] sm:$0xff]
    %v26 = vld [vmem:[%s1 + $0x8] sm:$0xff]
    %v27 = vld [vmem:[%s1 + $0x10] sm:$0xff]
    %v28 = vld [vmem:[%s1 + $0x18] sm:$0xff]
    %v29 = vld [vmem:[%s1 + $0x20] sm:$0xff]
    %v30 = vld [vmem:[%s1 + $0x28] sm:$0xff]
    %v31 = vld [vmem:[%s1 + $0x30] sm:$0xff]
    %v32 = vld [vmem:[%s1 + $0x38] sm:$0xff]
    %v33 = vld [vmem:[%s1 + $0x40] sm:$0xff]
    %v34 = vld [vmem:[%s1 + $0x48] sm:$0xff]
    %v35 = vld [vmem:[%s1 + $0x50] sm:$0xff]
    %v36 = vld [vmem:[%s1 + $0x58] sm:$0xff]
    %v37 = vld [vmem:[%s1 + $0x60] sm:$0xff]
    %v38 = vld [vmem:[%s1 + $0x68] sm:$0xff]
    %v39 = vld [vmem:[%s1 + $0x70] sm:$0xff]
    %v40 = vld [vmem:[%s1 + $0x78] sm:$0xff]
    %v41 = vld [vmem:[%s1 + $0x80] sm:$0xff]
    %v42 = vld [vmem:[%s1 + $0x88] sm:$0xff]
    %v43 = vld [vmem:[%s1 + $0x90] sm:$0xff]
    %v44 = vld [vmem:[%s1 + $0x98] sm:$0xff]
    %v45 = vld [vmem:[%s1 + $0xa0] sm:$0xff]
    %v46 = vld [vmem:[%s1 + $0xa8] sm:$0xff]
    %v47 = vld [vmem:[%s1 + $0xb0] sm:$0xff]
    %v48 = vld [vmem:[%s1 + $0xb8] sm:$0xff]
    %v49 = vld [vmem:[%s1 + $0xc0] sm:$0xff]
    %v50 = vld [vmem:[%s1 + $0xc8] sm:$0xff]
    %v51 = vld [vmem:[%s1 + $0xd0] sm:$0xff]
    %v52 = vld [vmem:[%s1 + $0xd8] sm:$0xff]
    %v53 = vld [vmem:[%s1 + $0xe0] sm:$0xff]
    %v54 = vld [vmem:[%s1 + $0xe8] sm:$0xff]
    %v55 = vld [vmem:[%s1 + $0xf0] sm:$0xff]
    %v56 = vld [vmem:[%s1 + $0xf8] sm:$0xff]
    %v57 = vld [vmem:[%s2] sm:$0xf]
    %v59 = vlaneseq
    %v60 = vshrl.u32 %v59, 7
    %v61 = vsub.s32 0, %v60
    %v62 = vrot.slane %v57, %v61
    %v63 = vlaneseq
    %v64 = vshrl.u32 %v63, 7
    %v65 = vsub.s32 1, %v64
    %v66 = vrot.slane %v57, %v65
    %v67 = vlaneseq
    %v68 = vshrl.u32 %v67, 7
    %v69 = vsub.s32 2, %v68
    %v70 = vrot.slane %v57, %v69
    %v71 = vlaneseq
    %v72 = vshrl.u32 %v71, 7
    %v73 = vsub.s32 3, %v72
    %v74 = vrot.slane %v57, %v73
    %v111 = vunpack.c.l.b16 %v25
    %v112 = vunpack.c.h.b16 %v25
    %v113 = vunpack.c.l.b16 %v26
    %v114 = vunpack.c.h.b16 %v26
    %v115 = vunpack.c.l.b16 %v27
    %v116 = vunpack.c.h.b16 %v27
    %v117 = vunpack.c.l.b16 %v28
    %v118 = vunpack.c.h.b16 %v28
    %v119 = vunpack.c.l.b16 %v29
    %v120 = vunpack.c.h.b16 %v29
    %v121 = vunpack.c.l.b16 %v30
    %v122 = vunpack.c.h.b16 %v30
    %v123 = vunpack.c.l.b16 %v31
    %v124 = vunpack.c.h.b16 %v31
    %v125 = vunpack.c.l.b16 %v32
    %v126 = vunpack.c.h.b16 %v32
    %v127 = vunpack.c.l.b16 %v33
    %v128 = vunpack.c.h.b16 %v33
    %v129 = vunpack.c.l.b16 %v34
    %v130 = vunpack.c.h.b16 %v34
    %v131 = vunpack.c.l.b16 %v35
    %v132 = vunpack.c.h.b16 %v35
    %v133 = vunpack.c.l.b16 %v36
    %v134 = vunpack.c.h.b16 %v36
    %v135 = vunpack.c.l.b16 %v37
    %v136 = vunpack.c.h.b16 %v37
    %v137 = vunpack.c.l.b16 %v38
    %v138 = vunpack.c.h.b16 %v38
    %v139 = vunpack.c.l.b16 %v39
    %v140 = vunpack.c.h.b16 %v39
    %v141 = vunpack.c.l.b16 %v40
    %v142 = vunpack.c.h.b16 %v40
    %v143 = vunpack.c.l.b16 %v41
    %v144 = vunpack.c.h.b16 %v41
    %v145 = vunpack.c.l.b16 %v42
    %v146 = vunpack.c.h.b16 %v42
    %v147 = vunpack.c.l.b16 %v43
    %v148 = vunpack.c.h.b16 %v43
    %v149 = vunpack.c.l.b16 %v44
    %v150 = vunpack.c.h.b16 %v44
    %v151 = vunpack.c.l.b16 %v45
    %v152 = vunpack.c.h.b16 %v45
    %v153 = vunpack.c.l.b16 %v46
    %v154 = vunpack.c.h.b16 %v46
    %v155 = vunpack.c.l.b16 %v47
    %v156 = vunpack.c.h.b16 %v47
    %v157 = vunpack.c.l.b16 %v48
    %v158 = vunpack.c.h.b16 %v48
    %v159 = vunpack.c.l.b16 %v49
    %v160 = vunpack.c.h.b16 %v49
    %v161 = vunpack.c.l.b16 %v50
    %v162 = vunpack.c.h.b16 %v50
    %v163 = vunpack.c.l.b16 %v51
    %v164 = vunpack.c.h.b16 %v51
    %v165 = vunpack.c.l.b16 %v52
    %v166 = vunpack.c.h.b16 %v52
    %v167 = vunpack.c.l.b16 %v53
    %v168 = vunpack.c.h.b16 %v53
    %v169 = vunpack.c.l.b16 %v54
    %v170 = vunpack.c.h.b16 %v54
    %v171 = vunpack.c.l.b16 %v55
    %v172 = vunpack.c.h.b16 %v55
    %v173 = vunpack.c.l.b16 %v56
    %v174 = vunpack.c.h.b16 %v56
    %v175 = vpack.c.b16 %v115, %v111
    %v176 = vpack.c.b16 %v116, %v112
    %v177 = vpack.c.b16 %v117, %v113
    %v178 = vpack.c.b16 %v118, %v114
    %v179 = vpack.c.b16 %v123, %v119
    %v180 = vpack.c.b16 %v124, %v120
    %v181 = vpack.c.b16 %v125, %v121
    %v182 = vpack.c.b16 %v126, %v122
    %v183 = vpack.c.b16 %v131, %v127
    %v184 = vpack.c.b16 %v132, %v128
    %v185 = vpack.c.b16 %v133, %v129
    %v186 = vpack.c.b16 %v134, %v130
    %v187 = vpack.c.b16 %v139, %v135
    %v188 = vpack.c.b16 %v140, %v136
    %v189 = vpack.c.b16 %v141, %v137
    %v190 = vpack.c.b16 %v142, %v138
    %v191 = vpack.c.b16 %v147, %v143
    %v192 = vpack.c.b16 %v148, %v144
    %v193 = vpack.c.b16 %v149, %v145
    %v194 = vpack.c.b16 %v150, %v146
    %v195 = vpack.c.b16 %v155, %v151
    %v196 = vpack.c.b16 %v156, %v152
    %v197 = vpack.c.b16 %v157, %v153
    %v198 = vpack.c.b16 %v158, %v154
    %v199 = vpack.c.b16 %v163, %v159
    %v200 = vpack.c.b16 %v164, %v160
    %v201 = vpack.c.b16 %v165, %v161
    %v202 = vpack.c.b16 %v166, %v162
    %v203 = vpack.c.b16 %v171, %v167
    %v204 = vpack.c.b16 %v172, %v168
    %v205 = vpack.c.b16 %v173, %v169
    %v206 = vpack.c.b16 %v174, %v170
    %239 = vmatprep.subr.bf16.mxu0 %v176
    %240 = vmatpush1.bf16.msra.mxu0 %v175
    %241 = vmatprep.subr.bf16.mxu0 %v180
    %242 = vmatpush1.bf16.msra.mxu0 %v179
    %243 = vmatprep.subr.bf16.mxu0 %v184
    %244 = vmatpush1.bf16.msra.mxu0 %v183
    %245 = vmatprep.subr.bf16.mxu0 %v188
    %246 = vmatpush1.bf16.msra.mxu0 %v187
    %247 = vmatprep.subr.bf16.mxu0 %v192
    %248 = vmatpush1.bf16.msra.mxu0 %v191
    %249 = vmatprep.subr.bf16.mxu0 %v196
    %250 = vmatpush1.bf16.msra.mxu0 %v195
    %251 = vmatprep.subr.bf16.mxu0 %v200
    %252 = vmatpush1.bf16.msra.mxu0 %v199
    %253 = vmatprep.subr.bf16.mxu0 %v204
    %254 = vmatpush1.bf16.msra.mxu0 %v203
    %255 = vmatprep.subr.bf16.mxu0 0
    %256 = vmatpush1.bf16.msra.mxu0 0
    %257 = vmatprep.subr.bf16.mxu0 0
    %258 = vmatpush1.bf16.msra.mxu0 0
    %259 = vmatprep.subr.bf16.mxu0 0
    %260 = vmatpush1.bf16.msra.mxu0 0
    %261 = vmatprep.subr.bf16.mxu0 0
    %262 = vmatpush1.bf16.msra.mxu0 0
    %263 = vmatprep.subr.bf16.mxu0 0
    %264 = vmatpush1.bf16.msra.mxu0 0
    %265 = vmatprep.subr.bf16.mxu0 0
    %266 = vmatpush1.bf16.msra.mxu0 0
    %267 = vmatprep.subr.bf16.mxu0 0
    %268 = vmatpush1.bf16.msra.mxu0 0
    %269 = vmatprep.subr.bf16.mxu0 0
    %270 = vmatpush1.bf16.msra.mxu0 0
    %271 = vmatprep.mubr.bf16.mxu0 0
    %272 = vmatmul.mubr.bf16.gmra.mrb[0].mxu0 %v24
    %v273 = vpop.f32.mrb[0].mxu0
    %v274 = vadd.f32 %v62, %v273
    %v275 = vpop.f32.mrb[0].mxu0
    %v276 = vadd.f32 %v66, %v275
    %v277 = vpop.f32.mrb[0].mxu0
    %v278 = vadd.f32 %v62, %v277
    %v279 = vpop.f32.mrb[0].mxu0
    %v280 = vadd.f32 %v66, %v279
    %281 = vdwg.mxu0
    %282 = vmatprep.subr.bf16.mxu0 %v178
    %283 = vmatpush1.bf16.msra.mxu0 %v177
    %284 = vmatprep.subr.bf16.mxu0 %v182
    %285 = vmatpush1.bf16.msra.mxu0 %v181
    %286 = vmatprep.subr.bf16.mxu0 %v186
    %287 = vmatpush1.bf16.msra.mxu0 %v185
    %288 = vmatprep.subr.bf16.mxu0 %v190
    %289 = vmatpush1.bf16.msra.mxu0 %v189
    %290 = vmatprep.subr.bf16.mxu0 %v194
    %291 = vmatpush1.bf16.msra.mxu0 %v193
    %292 = vmatprep.subr.bf16.mxu0 %v198
    %293 = vmatpush1.bf16.msra.mxu0 %v197
    %294 = vmatprep.subr.bf16.mxu0 %v202
    %295 = vmatpush1.bf16.msra.mxu0 %v201
    %296 = vmatprep.subr.bf16.mxu0 %v206
    %297 = vmatpush1.bf16.msra.mxu0 %v205
    %298 = vmatprep.subr.bf16.mxu0 0
    %299 = vmatpush1.bf16.msra.mxu0 0
    %300 = vmatprep.subr.bf16.mxu0 0
    %301 = vmatpush1.bf16.msra.mxu0 0
    %302 = vmatprep.subr.bf16.mxu0 0
    %303 = vmatpush1.bf16.msra.mxu0 0
    %304 = vmatprep.subr.bf16.mxu0 0
    %305 = vmatpush1.bf16.msra.mxu0 0
    %306 = vmatprep.subr.bf16.mxu0 0
    %307 = vmatpush1.bf16.msra.mxu0 0
    %308 = vmatprep.subr.bf16.mxu0 0
    %309 = vmatpush1.bf16.msra.mxu0 0
    %310 = vmatprep.subr.bf16.mxu0 0
    %311 = vmatpush1.bf16.msra.mxu0 0
    %312 = vmatprep.subr.bf16.mxu0 0
    %313 = vmatpush1.bf16.msra.mxu0 0
    %314 = vmatprep.mubr.bf16.mxu0 0
    %315 = vmatmul.mubr.bf16.gmra.mrb[0].mxu0 %v24
    %v316 = vpop.f32.mrb[0].mxu0
    %v317 = vadd.f32 %v70, %v316
    %v318 = vpop.f32.mrb[0].mxu0
    %v319 = vadd.f32 %v74, %v318
    %v320 = vpop.f32.mrb[0].mxu0
    %v321 = vadd.f32 %v70, %v320
    %v322 = vpop.f32.mrb[0].mxu0
    %v323 = vadd.f32 %v74, %v322
    %324 = vdwg.mxu0
    %v325 = vmax.f32 %v274, 0.0
    %v326 = vmax.f32 %v276, 0.0
    %v327 = vmax.f32 %v317, 0.0
    %v328 = vmax.f32 %v319, 0.0
    %v329 = vmax.f32 %v278, 0.0
    %v330 = vmax.f32 %v280, 0.0
    %v331 = vmax.f32 %v321, 0.0
    %v332 = vmax.f32 %v323, 0.0
    %v333 = vpack.c.bf16 %v329, %v325
    %v334 = vpack.c.bf16 %v330, %v326
    %v335 = vpack.c.bf16 %v331, %v327
    %v336 = vpack.c.bf16 %v332, %v328
    %v337 = vld [vmem:[%s3] sm:$0xff]
    %v338 = vld [vmem:[%s3 + $0x8] sm:$0xff]
    %v339 = vld [vmem:[%s3 + $0x10] sm:$0xff]
    %v340 = vld [vmem:[%s3 + $0x18] sm:$0xf]
    %v341 = vld [vmem:[%s3 + $0x1c] sm:$0xff]
    %v342 = vld [vmem:[%s3 + $0x24] sm:$0xff]
    %v343 = vld [vmem:[%s3 + $0x2c] sm:$0xff]
    %v344 = vld [vmem:[%s3 + $0x34] sm:$0xf]
    %v345 = vld [vmem:[%s3 + $0x38] sm:$0xff]
    %v346 = vld [vmem:[%s3 + $0x40] sm:$0xff]
    %v347 = vld [vmem:[%s3 + $0x48] sm:$0xff]
    %v348 = vld [vmem:[%s3 + $0x50] sm:$0xf]
    %v349 = vld [vmem:[%s3 + $0x54] sm:$0xff]
    %v350 = vld [vmem:[%s3 + $0x5c] sm:$0xff]
    %v351 = vld [vmem:[%s3 + $0x64] sm:$0xff]
    %v352 = vld [vmem:[%s3 + $0x6c] sm:$0xf]
    %v353 = vld [vmem:[%s3 + $0x70] sm:$0xff]
    %v354 = vld [vmem:[%s3 + $0x78] sm:$0xff]
    %v355 = vld [vmem:[%s3 + $0x80] sm:$0xff]
    %v356 = vld [vmem:[%s3 + $0x88] sm:$0xf]
    %v357 = vld [vmem:[%s3 + $0x8c] sm:$0xff]
    %v358 = vld [vmem:[%s3 + $0x94] sm:$0xff]
    %v359 = vld [vmem:[%s3 + $0x9c] sm:$0xff]
    %v360 = vld [vmem:[%s3 + $0xa4] sm:$0xf]
    %v361 = vld [vmem:[%s3 + $0xa8] sm:$0xff]
    %v362 = vld [vmem:[%s3 + $0xb0] sm:$0xff]
    %v363 = vld [vmem:[%s3 + $0xb8] sm:$0xff]
    %v364 = vld [vmem:[%s3 + $0xc0] sm:$0xf]
    %v365 = vld [vmem:[%s3 + $0xc4] sm:$0xff]
    %v366 = vld [vmem:[%s3 + $0xcc] sm:$0xff]
    %v367 = vld [vmem:[%s3 + $0xd4] sm:$0xff]
    %v368 = vld [vmem:[%s3 + $0xdc] sm:$0xf]
    %v369 = vld [vmem:[%s3 + $0xe0] sm:$0xff]
    %v370 = vld [vmem:[%s3 + $0xe8] sm:$0xff]
    %v371 = vld [vmem:[%s3 + $0xf0] sm:$0xff]
    %v372 = vld [vmem:[%s3 + $0xf8] sm:$0xf]
    %v373 = vld [vmem:[%s3 + $0xfc] sm:$0xff]
    %v374 = vld [vmem:[%s3 + $0x104] sm:$0xff]
    %v375 = vld [vmem:[%s3 + $0x10c] sm:$0xff]
    %v376 = vld [vmem:[%s3 + $0x114] sm:$0xf]
    %v377 = vld [vmem:[%s3 + $0x118] sm:$0xff]
    %v378 = vld [vmem:[%s3 + $0x120] sm:$0xff]
    %v379 = vld [vmem:[%s3 + $0x128] sm:$0xff]
    %v380 = vld [vmem:[%s3 + $0x130] sm:$0xf]
    %v381 = vld [vmem:[%s3 + $0x134] sm:$0xff]
    %v382 = vld [vmem:[%s3 + $0x13c] sm:$0xff]
    %v383 = vld [vmem:[%s3 + $0x144] sm:$0xff]
    %v384 = vld [vmem:[%s3 + $0x14c] sm:$0xf]
    %v385 = vld [vmem:[%s3 + $0x150] sm:$0xff]
    %v386 = vld [vmem:[%s3 + $0x158] sm:$0xff]
    %v387 = vld [vmem:[%s3 + $0x160] sm:$0xff]
    %v388 = vld [vmem:[%s3 + $0x168] sm:$0xf]
    %v389 = vld [vmem:[%s3 + $0x16c] sm:$0xff]
    %v390 = vld [vmem:[%s3 + $0x174] sm:$0xff]
    %v391 = vld [vmem:[%s3 + $0x17c] sm:$0xff]
    %v392 = vld [vmem:[%s3 + $0x184] sm:$0xf]
    %v393 = vld [vmem:[%s3 + $0x188] sm:$0xff]
    %v394 = vld [vmem:[%s3 + $0x190] sm:$0xff]
    %v395 = vld [vmem:[%s3 + $0x198] sm:$0xff]
    %v396 = vld [vmem:[%s3 + $0x1a0] sm:$0xf]
    %v397 = vld [vmem:[%s3 + $0x1a4] sm:$0xff]
    %v398 = vld [vmem:[%s3 + $0x1ac] sm:$0xff]
    %v399 = vld [vmem:[%s3 + $0x1b4] sm:$0xff]
    %v400 = vld [vmem:[%s3 + $0x1bc] sm:$0xf]
    %v401 = vld [vmem:[%s3 + $0x1c0] sm:$0xff]
    %v402 = vld [vmem:[%s3 + $0x1c8] sm:$0xff]
    %v403 = vld [vmem:[%s3 + $0x1d0] sm:$0xff]
    %v404 = vld [vmem:[%s3 + $0x1d8] sm:$0xf]
    %v405 = vld [vmem:[%s3 + $0x1dc] sm:$0xff]
    %v406 = vld [vmem:[%s3 + $0x1e4] sm:$0xff]
    %v407 = vld [vmem:[%s3 + $0x1ec] sm:$0xff]
    %v408 = vld [vmem:[%s3 + $0x1f4] sm:$0xf]
    %v409 = vld [vmem:[%s3 + $0x1f8] sm:$0xff]
    %v410 = vld [vmem:[%s3 + $0x200] sm:$0xff]
    %v411 = vld [vmem:[%s3 + $0x208] sm:$0xff]
    %v412 = vld [vmem:[%s3 + $0x210] sm:$0xf]
    %v413 = vld [vmem:[%s3 + $0x214] sm:$0xff]
    %v414 = vld [vmem:[%s3 + $0x21c] sm:$0xff]
    %v415 = vld [vmem:[%s3 + $0x224] sm:$0xff]
    %v416 = vld [vmem:[%s3 + $0x22c] sm:$0xf]
    %v417 = vld [vmem:[%s3 + $0x230] sm:$0xff]
    %v418 = vld [vmem:[%s3 + $0x238] sm:$0xff]
    %v419 = vld [vmem:[%s3 + $0x240] sm:$0xff]
    %v420 = vld [vmem:[%s3 + $0x248] sm:$0xf]
    %v421 = vld [vmem:[%s3 + $0x24c] sm:$0xff]
    %v422 = vld [vmem:[%s3 + $0x254] sm:$0xff]
    %v423 = vld [vmem:[%s3 + $0x25c] sm:$0xff]
    %v424 = vld [vmem:[%s3 + $0x264] sm:$0xf]
    %v425 = vld [vmem:[%s3 + $0x268] sm:$0xff]
    %v426 = vld [vmem:[%s3 + $0x270] sm:$0xff]
    %v427 = vld [vmem:[%s3 + $0x278] sm:$0xff]
    %v428 = vld [vmem:[%s3 + $0x280] sm:$0xf]
    %v429 = vld [vmem:[%s3 + $0x284] sm:$0xff]
    %v430 = vld [vmem:[%s3 + $0x28c] sm:$0xff]
    %v431 = vld [vmem:[%s3 + $0x294] sm:$0xff]
    %v432 = vld [vmem:[%s3 + $0x29c] sm:$0xf]
    %v433 = vld [vmem:[%s3 + $0x2a0] sm:$0xff]
    %v434 = vld [vmem:[%s3 + $0x2a8] sm:$0xff]
    %v435 = vld [vmem:[%s3 + $0x2b0] sm:$0xff]
    %v436 = vld [vmem:[%s3 + $0x2b8] sm:$0xf]
    %v437 = vld [vmem:[%s3 + $0x2bc] sm:$0xff]
    %v438 = vld [vmem:[%s3 + $0x2c4] sm:$0xff]
    %v439 = vld [vmem:[%s3 + $0x2cc] sm:$0xff]
    %v440 = vld [vmem:[%s3 + $0x2d4] sm:$0xf]
    %v441 = vld [vmem:[%s3 + $0x2d8] sm:$0xff]
    %v442 = vld [vmem:[%s3 + $0x2e0] sm:$0xff]
    %v443 = vld [vmem:[%s3 + $0x2e8] sm:$0xff]
    %v444 = vld [vmem:[%s3 + $0x2f0] sm:$0xf]
    %v445 = vld [vmem:[%s3 + $0x2f4] sm:$0xff]
    %v446 = vld [vmem:[%s3 + $0x2fc] sm:$0xff]
    %v447 = vld [vmem:[%s3 + $0x304] sm:$0xff]
    %v448 = vld [vmem:[%s3 + $0x30c] sm:$0xf]
    %v449 = vld [vmem:[%s3 + $0x310] sm:$0xff]
    %v450 = vld [vmem:[%s3 + $0x318] sm:$0xff]
    %v451 = vld [vmem:[%s3 + $0x320] sm:$0xff]
    %v452 = vld [vmem:[%s3 + $0x328] sm:$0xf]
    %v453 = vld [vmem:[%s3 + $0x32c] sm:$0xff]
    %v454 = vld [vmem:[%s3 + $0x334] sm:$0xff]
    %v455 = vld [vmem:[%s3 + $0x33c] sm:$0xff]
    %v456 = vld [vmem:[%s3 + $0x344] sm:$0xf]
    %v457 = vld [vmem:[%s3 + $0x348] sm:$0xff]
    %v458 = vld [vmem:[%s3 + $0x350] sm:$0xff]
    %v459 = vld [vmem:[%s3 + $0x358] sm:$0xff]
    %v460 = vld [vmem:[%s3 + $0x360] sm:$0xf]
    %v461 = vld [vmem:[%s3 + $0x364] sm:$0xff]
    %v462 = vld [vmem:[%s3 + $0x36c] sm:$0xff]
    %v463 = vld [vmem:[%s3 + $0x374] sm:$0xff]
    %v464 = vld [vmem:[%s3 + $0x37c] sm:$0xf]
    %v465 = vld [vmem:[%s3 + $0x380] sm:$0xff]
    %v466 = vld [vmem:[%s3 + $0x388] sm:$0xff]
    %v467 = vld [vmem:[%s3 + $0x390] sm:$0xff]
    %v468 = vld [vmem:[%s3 + $0x398] sm:$0xf]
    %v469 = vld [vmem:[%s3 + $0x39c] sm:$0xff]
    %v470 = vld [vmem:[%s3 + $0x3a4] sm:$0xff]
    %v471 = vld [vmem:[%s3 + $0x3ac] sm:$0xff]
    %v472 = vld [vmem:[%s3 + $0x3b4] sm:$0xf]
    %v473 = vld [vmem:[%s3 + $0x3b8] sm:$0xff]
    %v474 = vld [vmem:[%s3 + $0x3c0] sm:$0xff]
    %v475 = vld [vmem:[%s3 + $0x3c8] sm:$0xff]
    %v476 = vld [vmem:[%s3 + $0x3d0] sm:$0xf]
    %v477 = vld [vmem:[%s3 + $0x3d4] sm:$0xff]
    %v478 = vld [vmem:[%s3 + $0x3dc] sm:$0xff]
    %v479 = vld [vmem:[%s3 + $0x3e4] sm:$0xff]
    %v480 = vld [vmem:[%s3 + $0x3ec] sm:$0xf]
    %v481 = vld [vmem:[%s3 + $0x3f0] sm:$0xff]
    %v482 = vld [vmem:[%s3 + $0x3f8] sm:$0xff]
    %v483 = vld [vmem:[%s3 + $0x400] sm:$0xff]
    %v484 = vld [vmem:[%s3 + $0x408] sm:$0xf]
    %v485 = vld [vmem:[%s3 + $0x40c] sm:$0xff]
    %v486 = vld [vmem:[%s3 + $0x414] sm:$0xff]
    %v487 = vld [vmem:[%s3 + $0x41c] sm:$0xff]
    %v488 = vld [vmem:[%s3 + $0x424] sm:$0xf]
    %v489 = vld [vmem:[%s3 + $0x428] sm:$0xff]
    %v490 = vld [vmem:[%s3 + $0x430] sm:$0xff]
    %v491 = vld [vmem:[%s3 + $0x438] sm:$0xff]
    %v492 = vld [vmem:[%s3 + $0x440] sm:$0xf]
    %v493 = vld [vmem:[%s3 + $0x444] sm:$0xff]
    %v494 = vld [vmem:[%s3 + $0x44c] sm:$0xff]
    %v495 = vld [vmem:[%s3 + $0x454] sm:$0xff]
    %v496 = vld [vmem:[%s3 + $0x45c] sm:$0xf]
    %v497 = vld [vmem:[%s3 + $0x460] sm:$0xff]
    %v498 = vld [vmem:[%s3 + $0x468] sm:$0xff]
    %v499 = vld [vmem:[%s3 + $0x470] sm:$0xff]
    %v500 = vld [vmem:[%s3 + $0x478] sm:$0xf]
    %v501 = vld [vmem:[%s3 + $0x47c] sm:$0xff]
    %v502 = vld [vmem:[%s3 + $0x484] sm:$0xff]
    %v503 = vld [vmem:[%s3 + $0x48c] sm:$0xff]
    %v504 = vld [vmem:[%s3 + $0x494] sm:$0xf]
    %v505 = vld [vmem:[%s3 + $0x498] sm:$0xff]
    %v506 = vld [vmem:[%s3 + $0x4a0] sm:$0xff]
    %v507 = vld [vmem:[%s3 + $0x4a8] sm:$0xff]
    %v508 = vld [vmem:[%s3 + $0x4b0] sm:$0xf]
    %v509 = vld [vmem:[%s3 + $0x4b4] sm:$0xff]
    %v510 = vld [vmem:[%s3 + $0x4bc] sm:$0xff]
    %v511 = vld [vmem:[%s3 + $0x4c4] sm:$0xff]
    %v512 = vld [vmem:[%s3 + $0x4cc] sm:$0xf]
    %v513 = vld [vmem:[%s3 + $0x4d0] sm:$0xff]
    %v514 = vld [vmem:[%s3 + $0x4d8] sm:$0xff]
    %v515 = vld [vmem:[%s3 + $0x4e0] sm:$0xff]
    %v516 = vld [vmem:[%s3 + $0x4e8] sm:$0xf]
    %v517 = vld [vmem:[%s3 + $0x4ec] sm:$0xff]
    %v518 = vld [vmem:[%s3 + $0x4f4] sm:$0xff]
    %v519 = vld [vmem:[%s3 + $0x4fc] sm:$0xff]
    %v520 = vld [vmem:[%s3 + $0x504] sm:$0xf]
    %v521 = vld [vmem:[%s3 + $0x508] sm:$0xff]
    %v522 = vld [vmem:[%s3 + $0x510] sm:$0xff]
    %v523 = vld [vmem:[%s3 + $0x518] sm:$0xff]
    %v524 = vld [vmem:[%s3 + $0x520] sm:$0xf]
    %v525 = vld [vmem:[%s3 + $0x524] sm:$0xff]
    %v526 = vld [vmem:[%s3 + $0x52c] sm:$0xff]
    %v527 = vld [vmem:[%s3 + $0x534] sm:$0xff]
    %v528 = vld [vmem:[%s3 + $0x53c] sm:$0xf]
    %v529 = vld [vmem:[%s3 + $0x540] sm:$0xff]
    %v530 = vld [vmem:[%s3 + $0x548] sm:$0xff]
    %v531 = vld [vmem:[%s3 + $0x550] sm:$0xff]
    %v532 = vld [vmem:[%s3 + $0x558] sm:$0xf]
    %v533 = vld [vmem:[%s3 + $0x55c] sm:$0xff]
    %v534 = vld [vmem:[%s3 + $0x564] sm:$0xff]
    %v535 = vld [vmem:[%s3 + $0x56c] sm:$0xff]
    %v536 = vld [vmem:[%s3 + $0x574] sm:$0xf]
    %v537 = vld [vmem:[%s3 + $0x578] sm:$0xff]
    %v538 = vld [vmem:[%s3 + $0x580] sm:$0xff]
    %v539 = vld [vmem:[%s3 + $0x588] sm:$0xff]
    %v540 = vld [vmem:[%s3 + $0x590] sm:$0xf]
    %v541 = vld [vmem:[%s3 + $0x594] sm:$0xff]
    %v542 = vld [vmem:[%s3 + $0x59c] sm:$0xff]
    %v543 = vld [vmem:[%s3 + $0x5a4] sm:$0xff]
    %v544 = vld [vmem:[%s3 + $0x5ac] sm:$0xf]
    %v545 = vld [vmem:[%s3 + $0x5b0] sm:$0xff]
    %v546 = vld [vmem:[%s3 + $0x5b8] sm:$0xff]
    %v547 = vld [vmem:[%s3 + $0x5c0] sm:$0xff]
    %v548 = vld [vmem:[%s3 + $0x5c8] sm:$0xf]
    %v549 = vld [vmem:[%s3 + $0x5cc] sm:$0xff]
    %v550 = vld [vmem:[%s3 + $0x5d4] sm:$0xff]
    %v551 = vld [vmem:[%s3 + $0x5dc] sm:$0xff]
    %v552 = vld [vmem:[%s3 + $0x5e4] sm:$0xf]
    %v553 = vld [vmem:[%s3 + $0x5e8] sm:$0xff]
    %v554 = vld [vmem:[%s3 + $0x5f0] sm:$0xff]
    %v555 = vld [vmem:[%s3 + $0x5f8] sm:$0xff]
    %v556 = vld [vmem:[%s3 + $0x600] sm:$0xf]
    %v557 = vld [vmem:[%s3 + $0x604] sm:$0xff]
    %v558 = vld [vmem:[%s3 + $0x60c] sm:$0xff]
    %v559 = vld [vmem:[%s3 + $0x614] sm:$0xff]
    %v560 = vld [vmem:[%s3 + $0x61c] sm:$0xf]
    %v561 = vld [vmem:[%s3 + $0x620] sm:$0xff]
    %v562 = vld [vmem:[%s3 + $0x628] sm:$0xff]
    %v563 = vld [vmem:[%s3 + $0x630] sm:$0xff]
    %v564 = vld [vmem:[%s3 + $0x638] sm:$0xf]
    %v565 = vld [vmem:[%s3 + $0x63c] sm:$0xff]
    %v566 = vld [vmem:[%s3 + $0x644] sm:$0xff]
    %v567 = vld [vmem:[%s3 + $0x64c] sm:$0xff]
    %v568 = vld [vmem:[%s3 + $0x654] sm:$0xf]
    %v569 = vld [vmem:[%s3 + $0x658] sm:$0xff]
    %v570 = vld [vmem:[%s3 + $0x660] sm:$0xff]
    %v571 = vld [vmem:[%s3 + $0x668] sm:$0xff]
    %v572 = vld [vmem:[%s3 + $0x670] sm:$0xf]
    %v573 = vld [vmem:[%s3 + $0x674] sm:$0xff]
    %v574 = vld [vmem:[%s3 + $0x67c] sm:$0xff]
    %v575 = vld [vmem:[%s3 + $0x684] sm:$0xff]
    %v576 = vld [vmem:[%s3 + $0x68c] sm:$0xf]
    %v577 = vld [vmem:[%s3 + $0x690] sm:$0xff]
    %v578 = vld [vmem:[%s3 + $0x698] sm:$0xff]
    %v579 = vld [vmem:[%s3 + $0x6a0] sm:$0xff]
    %v580 = vld [vmem:[%s3 + $0x6a8] sm:$0xf]
    %v581 = vld [vmem:[%s3 + $0x6ac] sm:$0xff]
    %v582 = vld [vmem:[%s3 + $0x6b4] sm:$0xff]
    %v583 = vld [vmem:[%s3 + $0x6bc] sm:$0xff]
    %v584 = vld [vmem:[%s3 + $0x6c4] sm:$0xf]
    %v585 = vld [vmem:[%s3 + $0x6c8] sm:$0xff]
    %v586 = vld [vmem:[%s3 + $0x6d0] sm:$0xff]
    %v587 = vld [vmem:[%s3 + $0x6d8] sm:$0xff]
    %v588 = vld [vmem:[%s3 + $0x6e0] sm:$0xf]
    %v589 = vld [vmem:[%s3 + $0x6e4] sm:$0xff]
    %v590 = vld [vmem:[%s3 + $0x6ec] sm:$0xff]
    %v591 = vld [vmem:[%s3 + $0x6f4] sm:$0xff]
    %v592 = vld [vmem:[%s3 + $0x6fc] sm:$0xf]
    %v593 = vld [vmem:[%s4] sm:$0x7f]
    %v595 = vlaneseq
    %v596 = vshrl.u32 %v595, 7
    %v597 = vsub.s32 0, %v596
    %v598 = vrot.slane %v593, %v597
    %v599 = vlaneseq
    %v600 = vshrl.u32 %v599, 7
    %v601 = vsub.s32 1, %v600
    %v602 = vrot.slane %v593, %v601
    %v603 = vlaneseq
    %v604 = vshrl.u32 %v603, 7
    %v605 = vsub.s32 2, %v604
    %v606 = vrot.slane %v593, %v605
    %v607 = vlaneseq
    %v608 = vshrl.u32 %v607, 7
    %v609 = vsub.s32 3, %v608
    %v610 = vrot.slane %v593, %v609
    %v611 = vlaneseq
    %v612 = vshrl.u32 %v611, 7
    %v613 = vsub.s32 4, %v612
    %v614 = vrot.slane %v593, %v613
    %v615 = vlaneseq
    %v616 = vshrl.u32 %v615, 7
    %v617 = vsub.s32 5, %v616
    %v618 = vrot.slane %v593, %v617
    %v619 = vlaneseq
    %v620 = vshrl.u32 %v619, 7
    %v621 = vsub.s32 6, %v620
    %v622 = vrot.slane %v593, %v621
    %v886 = vunpack.c.l.b16 %v337
    %v887 = vunpack.c.h.b16 %v337
    %v888 = vunpack.c.l.b16 %v338
    %v889 = vunpack.c.h.b16 %v338
    %v890 = vunpack.c.l.b16 %v339
    %v891 = vunpack.c.h.b16 %v339
    %v892 = vunpack.c.l.b16 %v340
    %v893 = vunpack.c.l.b16 %v341
    %v894 = vunpack.c.h.b16 %v341
    %v895 = vunpack.c.l.b16 %v342
    %v896 = vunpack.c.h.b16 %v342
    %v897 = vunpack.c.l.b16 %v343
    %v898 = vunpack.c.h.b16 %v343
    %v899 = vunpack.c.l.b16 %v344
    %v900 = vunpack.c.l.b16 %v345
    %v901 = vunpack.c.h.b16 %v345
    %v902 = vunpack.c.l.b16 %v346
    %v903 = vunpack.c.h.b16 %v346
    %v904 = vunpack.c.l.b16 %v347
    %v905 = vunpack.c.h.b16 %v347
    %v906 = vunpack.c.l.b16 %v348
    %v907 = vunpack.c.l.b16 %v349
    %v908 = vunpack.c.h.b16 %v349
    %v909 = vunpack.c.l.b16 %v350
    %v910 = vunpack.c.h.b16 %v350
    %v911 = vunpack.c.l.b16 %v351
    %v912 = vunpack.c.h.b16 %v351
    %v913 = vunpack.c.l.b16 %v352
    %v914 = vunpack.c.l.b16 %v353
    %v915 = vunpack.c.h.b16 %v353
    %v916 = vunpack.c.l.b16 %v354
    %v917 = vunpack.c.h.b16 %v354
    %v918 = vunpack.c.l.b16 %v355
    %v919 = vunpack.c.h.b16 %v355
    %v920 = vunpack.c.l.b16 %v356
    %v921 = vunpack.c.l.b16 %v357
    %v922 = vunpack.c.h.b16 %v357
    %v923 = vunpack.c.l.b16 %v358
    %v924 = vunpack.c.h.b16 %v358
    %v925 = vunpack.c.l.b16 %v359
    %v926 = vunpack.c.h.b16 %v359
    %v927 = vunpack.c.l.b16 %v360
    %v928 = vunpack.c.l.b16 %v361
    %v929 = vunpack.c.h.b16 %v361
    %v930 = vunpack.c.l.b16 %v362
    %v931 = vunpack.c.h.b16 %v362
    %v932 = vunpack.c.l.b16 %v363
    %v933 = vunpack.c.h.b16 %v363
    %v934 = vunpack.c.l.b16 %v364
    %v935 = vunpack.c.l.b16 %v365
    %v936 = vunpack.c.h.b16 %v365
    %v937 = vunpack.c.l.b16 %v366
    %v938 = vunpack.c.h.b16 %v366
    %v939 = vunpack.c.l.b16 %v367
    %v940 = vunpack.c.h.b16 %v367
    %v941 = vunpack.c.l.b16 %v368
    %v942 = vunpack.c.l.b16 %v369
    %v943 = vunpack.c.h.b16 %v369
    %v944 = vunpack.c.l.b16 %v370
    %v945 = vunpack.c.h.b16 %v370
    %v946 = vunpack.c.l.b16 %v371
    %v947 = vunpack.c.h.b16 %v371
    %v948 = vunpack.c.l.b16 %v372
    %v949 = vunpack.c.l.b16 %v373
    %v950 = vunpack.c.h.b16 %v373
    %v951 = vunpack.c.l.b16 %v374
    %v952 = vunpack.c.h.b16 %v374
    %v953 = vunpack.c.l.b16 %v375
    %v954 = vunpack.c.h.b16 %v375
    %v955 = vunpack.c.l.b16 %v376
    %v956 = vunpack.c.l.b16 %v377
    %v957 = vunpack.c.h.b16 %v377
    %v958 = vunpack.c.l.b16 %v378
    %v959 = vunpack.c.h.b16 %v378
    %v960 = vunpack.c.l.b16 %v379
    %v961 = vunpack.c.h.b16 %v379
    %v962 = vunpack.c.l.b16 %v380
    %v963 = vunpack.c.l.b16 %v381
    %v964 = vunpack.c.h.b16 %v381
    %v965 = vunpack.c.l.b16 %v382
    %v966 = vunpack.c.h.b16 %v382
    %v967 = vunpack.c.l.b16 %v383
    %v968 = vunpack.c.h.b16 %v383
    %v969 = vunpack.c.l.b16 %v384
    %v970 = vunpack.c.l.b16 %v385
    %v971 = vunpack.c.h.b16 %v385
    %v972 = vunpack.c.l.b16 %v386
    %v973 = vunpack.c.h.b16 %v386
    %v974 = vunpack.c.l.b16 %v387
    %v975 = vunpack.c.h.b16 %v387
    %v976 = vunpack.c.l.b16 %v388
    %v977 = vunpack.c.l.b16 %v389
    %v978 = vunpack.c.h.b16 %v389
    %v979 = vunpack.c.l.b16 %v390
    %v980 = vunpack.c.h.b16 %v390
    %v981 = vunpack.c.l.b16 %v391
    %v982 = vunpack.c.h.b16 %v391
    %v983 = vunpack.c.l.b16 %v392
    %v984 = vunpack.c.l.b16 %v393
    %v985 = vunpack.c.h.b16 %v393
    %v986 = vunpack.c.l.b16 %v394
    %v987 = vunpack.c.h.b16 %v394
    %v988 = vunpack.c.l.b16 %v395
    %v989 = vunpack.c.h.b16 %v395
    %v990 = vunpack.c.l.b16 %v396
    %v991 = vunpack.c.l.b16 %v397
    %v992 = vunpack.c.h.b16 %v397
    %v993 = vunpack.c.l.b16 %v398
    %v994 = vunpack.c.h.b16 %v398
    %v995 = vunpack.c.l.b16 %v399
    %v996 = vunpack.c.h.b16 %v399
    %v997 = vunpack.c.l.b16 %v400
    %v998 = vunpack.c.l.b16 %v401
    %v999 = vunpack.c.h.b16 %v401
    %v1000 = vunpack.c.l.b16 %v402
    %v1001 = vunpack.c.h.b16 %v402
    %v1002 = vunpack.c.l.b16 %v403
    %v1003 = vunpack.c.h.b16 %v403
    %v1004 = vunpack.c.l.b16 %v404
    %v1005 = vunpack.c.l.b16 %v405
    %v1006 = vunpack.c.h.b16 %v405
    %v1007 = vunpack.c.l.b16 %v406
    %v1008 = vunpack.c.h.b16 %v406
    %v1009 = vunpack.c.l.b16 %v407
    %v1010 = vunpack.c.h.b16 %v407
    %v1011 = vunpack.c.l.b16 %v408
    %v1012 = vunpack.c.l.b16 %v409
    %v1013 = vunpack.c.h.b16 %v409
    %v1014 = vunpack.c.l.b16 %v410
    %v1015 = vunpack.c.h.b16 %v410
    %v1016 = vunpack.c.l.b16 %v411
    %v1017 = vunpack.c.h.b16 %v411
    %v1018 = vunpack.c.l.b16 %v412
    %v1019 = vunpack.c.l.b16 %v413
    %v1020 = vunpack.c.h.b16 %v413
    %v1021 = vunpack.c.l.b16 %v414
    %v1022 = vunpack.c.h.b16 %v414
    %v1023 = vunpack.c.l.b16 %v415
    %v1024 = vunpack.c.h.b16 %v415
    %v1025 = vunpack.c.l.b16 %v416
    %v1026 = vunpack.c.l.b16 %v417
    %v1027 = vunpack.c.h.b16 %v417
    %v1028 = vunpack.c.l.b16 %v418
    %v1029 = vunpack.c.h.b16 %v418
    %v1030 = vunpack.c.l.b16 %v419
    %v1031 = vunpack.c.h.b16 %v419
    %v1032 = vunpack.c.l.b16 %v420
    %v1033 = vunpack.c.l.b16 %v421
    %v1034 = vunpack.c.h.b16 %v421
    %v1035 = vunpack.c.l.b16 %v422
    %v1036 = vunpack.c.h.b16 %v422
    %v1037 = vunpack.c.l.b16 %v423
    %v1038 = vunpack.c.h.b16 %v423
    %v1039 = vunpack.c.l.b16 %v424
    %v1040 = vunpack.c.l.b16 %v425
    %v1041 = vunpack.c.h.b16 %v425
    %v1042 = vunpack.c.l.b16 %v426
    %v1043 = vunpack.c.h.b16 %v426
    %v1044 = vunpack.c.l.b16 %v427
    %v1045 = vunpack.c.h.b16 %v427
    %v1046 = vunpack.c.l.b16 %v428
    %v1047 = vunpack.c.l.b16 %v429
    %v1048 = vunpack.c.h.b16 %v429
    %v1049 = vunpack.c.l.b16 %v430
    %v1050 = vunpack.c.h.b16 %v430
    %v1051 = vunpack.c.l.b16 %v431
    %v1052 = vunpack.c.h.b16 %v431
    %v1053 = vunpack.c.l.b16 %v432
    %v1054 = vunpack.c.l.b16 %v433
    %v1055 = vunpack.c.h.b16 %v433
    %v1056 = vunpack.c.l.b16 %v434
    %v1057 = vunpack.c.h.b16 %v434
    %v1058 = vunpack.c.l.b16 %v435
    %v1059 = vunpack.c.h.b16 %v435
    %v1060 = vunpack.c.l.b16 %v436
    %v1061 = vunpack.c.l.b16 %v437
    %v1062 = vunpack.c.h.b16 %v437
    %v1063 = vunpack.c.l.b16 %v438
    %v1064 = vunpack.c.h.b16 %v438
    %v1065 = vunpack.c.l.b16 %v439
    %v1066 = vunpack.c.h.b16 %v439
    %v1067 = vunpack.c.l.b16 %v440
    %v1068 = vunpack.c.l.b16 %v441
    %v1069 = vunpack.c.h.b16 %v441
    %v1070 = vunpack.c.l.b16 %v442
    %v1071 = vunpack.c.h.b16 %v442
    %v1072 = vunpack.c.l.b16 %v443
    %v1073 = vunpack.c.h.b16 %v443
    %v1074 = vunpack.c.l.b16 %v444
    %v1075 = vunpack.c.l.b16 %v445
    %v1076 = vunpack.c.h.b16 %v445
    %v1077 = vunpack.c.l.b16 %v446
    %v1078 = vunpack.c.h.b16 %v446
    %v1079 = vunpack.c.l.b16 %v447
    %v1080 = vunpack.c.h.b16 %v447
    %v1081 = vunpack.c.l.b16 %v448
    %v1082 = vunpack.c.l.b16 %v449
    %v1083 = vunpack.c.h.b16 %v449
    %v1084 = vunpack.c.l.b16 %v450
    %v1085 = vunpack.c.h.b16 %v450
    %v1086 = vunpack.c.l.b16 %v451
    %v1087 = vunpack.c.h.b16 %v451
    %v1088 = vunpack.c.l.b16 %v452
    %v1089 = vunpack.c.l.b16 %v453
    %v1090 = vunpack.c.h.b16 %v453
    %v1091 = vunpack.c.l.b16 %v454
    %v1092 = vunpack.c.h.b16 %v454
    %v1093 = vunpack.c.l.b16 %v455
    %v1094 = vunpack.c.h.b16 %v455
    %v1095 = vunpack.c.l.b16 %v456
    %v1096 = vunpack.c.l.b16 %v457
    %v1097 = vunpack.c.h.b16 %v457
    %v1098 = vunpack.c.l.b16 %v458
    %v1099 = vunpack.c.h.b16 %v458
    %v1100 = vunpack.c.l.b16 %v459
    %v1101 = vunpack.c.h.b16 %v459
    %v1102 = vunpack.c.l.b16 %v460
    %v1103 = vunpack.c.l.b16 %v461
    %v1104 = vunpack.c.h.b16 %v461
    %v1105 = vunpack.c.l.b16 %v462
    %v1106 = vunpack.c.h.b16 %v462
    %v1107 = vunpack.c.l.b16 %v463
    %v1108 = vunpack.c.h.b16 %v463
    %v1109 = vunpack.c.l.b16 %v464
    %v1110 = vunpack.c.l.b16 %v465
    %v1111 = vunpack.c.h.b16 %v465
    %v1112 = vunpack.c.l.b16 %v466
    %v1113 = vunpack.c.h.b16 %v466
    %v1114 = vunpack.c.l.b16 %v467
    %v1115 = vunpack.c.h.b16 %v467
    %v1116 = vunpack.c.l.b16 %v468
    %v1117 = vunpack.c.l.b16 %v469
    %v1118 = vunpack.c.h.b16 %v469
    %v1119 = vunpack.c.l.b16 %v470
    %v1120 = vunpack.c.h.b16 %v470
    %v1121 = vunpack.c.l.b16 %v471
    %v1122 = vunpack.c.h.b16 %v471
    %v1123 = vunpack.c.l.b16 %v472
    %v1124 = vunpack.c.l.b16 %v473
    %v1125 = vunpack.c.h.b16 %v473
    %v1126 = vunpack.c.l.b16 %v474
    %v1127 = vunpack.c.h.b16 %v474
    %v1128 = vunpack.c.l.b16 %v475
    %v1129 = vunpack.c.h.b16 %v475
    %v1130 = vunpack.c.l.b16 %v476
    %v1131 = vunpack.c.l.b16 %v477
    %v1132 = vunpack.c.h.b16 %v477
    %v1133 = vunpack.c.l.b16 %v478
    %v1134 = vunpack.c.h.b16 %v478
    %v1135 = vunpack.c.l.b16 %v479
    %v1136 = vunpack.c.h.b16 %v479
    %v1137 = vunpack.c.l.b16 %v480
    %v1138 = vunpack.c.l.b16 %v481
    %v1139 = vunpack.c.h.b16 %v481
    %v1140 = vunpack.c.l.b16 %v482
    %v1141 = vunpack.c.h.b16 %v482
    %v1142 = vunpack.c.l.b16 %v483
    %v1143 = vunpack.c.h.b16 %v483
    %v1144 = vunpack.c.l.b16 %v484
    %v1145 = vunpack.c.l.b16 %v485
    %v1146 = vunpack.c.h.b16 %v485
    %v1147 = vunpack.c.l.b16 %v486
    %v1148 = vunpack.c.h.b16 %v486
    %v1149 = vunpack.c.l.b16 %v487
    %v1150 = vunpack.c.h.b16 %v487
    %v1151 = vunpack.c.l.b16 %v488
    %v1152 = vunpack.c.l.b16 %v489
    %v1153 = vunpack.c.h.b16 %v489
    %v1154 = vunpack.c.l.b16 %v490
    %v1155 = vunpack.c.h.b16 %v490
    %v1156 = vunpack.c.l.b16 %v491
    %v1157 = vunpack.c.h.b16 %v491
    %v1158 = vunpack.c.l.b16 %v492
    %v1159 = vunpack.c.l.b16 %v493
    %v1160 = vunpack.c.h.b16 %v493
    %v1161 = vunpack.c.l.b16 %v494
    %v1162 = vunpack.c.h.b16 %v494
    %v1163 = vunpack.c.l.b16 %v495
    %v1164 = vunpack.c.h.b16 %v495
    %v1165 = vunpack.c.l.b16 %v496
    %v1166 = vunpack.c.l.b16 %v497
    %v1167 = vunpack.c.h.b16 %v497
    %v1168 = vunpack.c.l.b16 %v498
    %v1169 = vunpack.c.h.b16 %v498
    %v1170 = vunpack.c.l.b16 %v499
    %v1171 = vunpack.c.h.b16 %v499
    %v1172 = vunpack.c.l.b16 %v500
    %v1173 = vunpack.c.l.b16 %v501
    %v1174 = vunpack.c.h.b16 %v501
    %v1175 = vunpack.c.l.b16 %v502
    %v1176 = vunpack.c.h.b16 %v502
    %v1177 = vunpack.c.l.b16 %v503
    %v1178 = vunpack.c.h.b16 %v503
    %v1179 = vunpack.c.l.b16 %v504
    %v1180 = vunpack.c.l.b16 %v505
    %v1181 = vunpack.c.h.b16 %v505
    %v1182 = vunpack.c.l.b16 %v506
    %v1183 = vunpack.c.h.b16 %v506
    %v1184 = vunpack.c.l.b16 %v507
    %v1185 = vunpack.c.h.b16 %v507
    %v1186 = vunpack.c.l.b16 %v508
    %v1187 = vunpack.c.l.b16 %v509
    %v1188 = vunpack.c.h.b16 %v509
    %v1189 = vunpack.c.l.b16 %v510
    %v1190 = vunpack.c.h.b16 %v510
    %v1191 = vunpack.c.l.b16 %v511
    %v1192 = vunpack.c.h.b16 %v511
    %v1193 = vunpack.c.l.b16 %v512
    %v1194 = vunpack.c.l.b16 %v513
    %v1195 = vunpack.c.h.b16 %v513
    %v1196 = vunpack.c.l.b16 %v514
    %v1197 = vunpack.c.h.b16 %v514
    %v1198 = vunpack.c.l.b16 %v515
    %v1199 = vunpack.c.h.b16 %v515
    %v1200 = vunpack.c.l.b16 %v516
    %v1201 = vunpack.c.l.b16 %v517
    %v1202 = vunpack.c.h.b16 %v517
    %v1203 = vunpack.c.l.b16 %v518
    %v1204 = vunpack.c.h.b16 %v518
    %v1205 = vunpack.c.l.b16 %v519
    %v1206 = vunpack.c.h.b16 %v519
    %v1207 = vunpack.c.l.b16 %v520
    %v1208 = vunpack.c.l.b16 %v521
    %v1209 = vunpack.c.h.b16 %v521
    %v1210 = vunpack.c.l.b16 %v522
    %v1211 = vunpack.c.h.b16 %v522
    %v1212 = vunpack.c.l.b16 %v523
    %v1213 = vunpack.c.h.b16 %v523
    %v1214 = vunpack.c.l.b16 %v524
    %v1215 = vunpack.c.l.b16 %v525
    %v1216 = vunpack.c.h.b16 %v525
    %v1217 = vunpack.c.l.b16 %v526
    %v1218 = vunpack.c.h.b16 %v526
    %v1219 = vunpack.c.l.b16 %v527
    %v1220 = vunpack.c.h.b16 %v527
    %v1221 = vunpack.c.l.b16 %v528
    %v1222 = vunpack.c.l.b16 %v529
    %v1223 = vunpack.c.h.b16 %v529
    %v1224 = vunpack.c.l.b16 %v530
    %v1225 = vunpack.c.h.b16 %v530
    %v1226 = vunpack.c.l.b16 %v531
    %v1227 = vunpack.c.h.b16 %v531
    %v1228 = vunpack.c.l.b16 %v532
    %v1229 = vunpack.c.l.b16 %v533
    %v1230 = vunpack.c.h.b16 %v533
    %v1231 = vunpack.c.l.b16 %v534
    %v1232 = vunpack.c.h.b16 %v534
    %v1233 = vunpack.c.l.b16 %v535
    %v1234 = vunpack.c.h.b16 %v535
    %v1235 = vunpack.c.l.b16 %v536
    %v1236 = vunpack.c.l.b16 %v537
    %v1237 = vunpack.c.h.b16 %v537
    %v1238 = vunpack.c.l.b16 %v538
    %v1239 = vunpack.c.h.b16 %v538
    %v1240 = vunpack.c.l.b16 %v539
    %v1241 = vunpack.c.h.b16 %v539
    %v1242 = vunpack.c.l.b16 %v540
    %v1243 = vunpack.c.l.b16 %v541
    %v1244 = vunpack.c.h.b16 %v541
    %v1245 = vunpack.c.l.b16 %v542
    %v1246 = vunpack.c.h.b16 %v542
    %v1247 = vunpack.c.l.b16 %v543
    %v1248 = vunpack.c.h.b16 %v543
    %v1249 = vunpack.c.l.b16 %v544
    %v1250 = vunpack.c.l.b16 %v545
    %v1251 = vunpack.c.h.b16 %v545
    %v1252 = vunpack.c.l.b16 %v546
    %v1253 = vunpack.c.h.b16 %v546
    %v1254 = vunpack.c.l.b16 %v547
    %v1255 = vunpack.c.h.b16 %v547
    %v1256 = vunpack.c.l.b16 %v548
    %v1257 = vunpack.c.l.b16 %v549
    %v1258 = vunpack.c.h.b16 %v549
    %v1259 = vunpack.c.l.b16 %v550
    %v1260 = vunpack.c.h.b16 %v550
    %v1261 = vunpack.c.l.b16 %v551
    %v1262 = vunpack.c.h.b16 %v551
    %v1263 = vunpack.c.l.b16 %v552
    %v1264 = vunpack.c.l.b16 %v553
    %v1265 = vunpack.c.h.b16 %v553
    %v1266 = vunpack.c.l.b16 %v554
    %v1267 = vunpack.c.h.b16 %v554
    %v1268 = vunpack.c.l.b16 %v555
    %v1269 = vunpack.c.h.b16 %v555
    %v1270 = vunpack.c.l.b16 %v556
    %v1271 = vunpack.c.l.b16 %v557
    %v1272 = vunpack.c.h.b16 %v557
    %v1273 = vunpack.c.l.b16 %v558
    %v1274 = vunpack.c.h.b16 %v558
    %v1275 = vunpack.c.l.b16 %v559
    %v1276 = vunpack.c.h.b16 %v559
    %v1277 = vunpack.c.l.b16 %v560
    %v1278 = vunpack.c.l.b16 %v561
    %v1279 = vunpack.c.h.b16 %v561
    %v1280 = vunpack.c.l.b16 %v562
    %v1281 = vunpack.c.h.b16 %v562
    %v1282 = vunpack.c.l.b16 %v563
    %v1283 = vunpack.c.h.b16 %v563
    %v1284 = vunpack.c.l.b16 %v564
    %v1285 = vunpack.c.l.b16 %v565
    %v1286 = vunpack.c.h.b16 %v565
    %v1287 = vunpack.c.l.b16 %v566
    %v1288 = vunpack.c.h.b16 %v566
    %v1289 = vunpack.c.l.b16 %v567
    %v1290 = vunpack.c.h.b16 %v567
    %v1291 = vunpack.c.l.b16 %v568
    %v1292 = vunpack.c.l.b16 %v569
    %v1293 = vunpack.c.h.b16 %v569
    %v1294 = vunpack.c.l.b16 %v570
    %v1295 = vunpack.c.h.b16 %v570
    %v1296 = vunpack.c.l.b16 %v571
    %v1297 = vunpack.c.h.b16 %v571
    %v1298 = vunpack.c.l.b16 %v572
    %v1299 = vunpack.c.l.b16 %v573
    %v1300 = vunpack.c.h.b16 %v573
    %v1301 = vunpack.c.l.b16 %v574
    %v1302 = vunpack.c.h.b16 %v574
    %v1303 = vunpack.c.l.b16 %v575
    %v1304 = vunpack.c.h.b16 %v575
    %v1305 = vunpack.c.l.b16 %v576
    %v1306 = vunpack.c.l.b16 %v577
    %v1307 = vunpack.c.h.b16 %v577
    %v1308 = vunpack.c.l.b16 %v578
    %v1309 = vunpack.c.h.b16 %v578
    %v1310 = vunpack.c.l.b16 %v579
    %v1311 = vunpack.c.h.b16 %v579
    %v1312 = vunpack.c.l.b16 %v580
    %v1313 = vunpack.c.l.b16 %v581
    %v1314 = vunpack.c.h.b16 %v581
    %v1315 = vunpack.c.l.b16 %v582
    %v1316 = vunpack.c.h.b16 %v582
    %v1317 = vunpack.c.l.b16 %v583
    %v1318 = vunpack.c.h.b16 %v583
    %v1319 = vunpack.c.l.b16 %v584
    %v1320 = vunpack.c.l.b16 %v585
    %v1321 = vunpack.c.h.b16 %v585
    %v1322 = vunpack.c.l.b16 %v586
    %v1323 = vunpack.c.h.b16 %v586
    %v1324 = vunpack.c.l.b16 %v587
    %v1325 = vunpack.c.h.b16 %v587
    %v1326 = vunpack.c.l.b16 %v588
    %v1327 = vunpack.c.l.b16 %v589
    %v1328 = vunpack.c.h.b16 %v589
    %v1329 = vunpack.c.l.b16 %v590
    %v1330 = vunpack.c.h.b16 %v590
    %v1331 = vunpack.c.l.b16 %v591
    %v1332 = vunpack.c.h.b16 %v591
    %v1333 = vunpack.c.l.b16 %v592
    %v1334 = vpack.c.b16 %v893, %v886
    %v1335 = vpack.c.b16 %v894, %v887
    %v1336 = vpack.c.b16 %v895, %v888
    %v1337 = vpack.c.b16 %v896, %v889
    %v1338 = vpack.c.b16 %v897, %v890
    %v1339 = vpack.c.b16 %v898, %v891
    %v1340 = vpack.c.b16 %v899, %v892
    %v1341 = vpack.c.b16 %v907, %v900
    %v1342 = vpack.c.b16 %v908, %v901
    %v1343 = vpack.c.b16 %v909, %v902
    %v1344 = vpack.c.b16 %v910, %v903
    %v1345 = vpack.c.b16 %v911, %v904
    %v1346 = vpack.c.b16 %v912, %v905
    %v1347 = vpack.c.b16 %v913, %v906
    %v1348 = vpack.c.b16 %v921, %v914
    %v1349 = vpack.c.b16 %v922, %v915
    %v1350 = vpack.c.b16 %v923, %v916
    %v1351 = vpack.c.b16 %v924, %v917
    %v1352 = vpack.c.b16 %v925, %v918
    %v1353 = vpack.c.b16 %v926, %v919
    %v1354 = vpack.c.b16 %v927, %v920
    %v1355 = vpack.c.b16 %v935, %v928
    %v1356 = vpack.c.b16 %v936, %v929
    %v1357 = vpack.c.b16 %v937, %v930
    %v1358 = vpack.c.b16 %v938, %v931
    %v1359 = vpack.c.b16 %v939, %v932
    %v1360 = vpack.c.b16 %v940, %v933
    %v1361 = vpack.c.b16 %v941, %v934
    %v1362 = vpack.c.b16 %v949, %v942
    %v1363 = vpack.c.b16 %v950, %v943
    %v1364 = vpack.c.b16 %v951, %v944
    %v1365 = vpack.c.b16 %v952, %v945
    %v1366 = vpack.c.b16 %v953, %v946
    %v1367 = vpack.c.b16 %v954, %v947
    %v1368 = vpack.c.b16 %v955, %v948
    %v1369 = vpack.c.b16 %v963, %v956
    %v1370 = vpack.c.b16 %v964, %v957
    %v1371 = vpack.c.b16 %v965, %v958
    %v1372 = vpack.c.b16 %v966, %v959
    %v1373 = vpack.c.b16 %v967, %v960
    %v1374 = vpack.c.b16 %v968, %v961
    %v1375 = vpack.c.b16 %v969, %v962
    %v1376 = vpack.c.b16 %v977, %v970
    %v1377 = vpack.c.b16 %v978, %v971
    %v1378 = vpack.c.b16 %v979, %v972
    %v1379 = vpack.c.b16 %v980, %v973
    %v1380 = vpack.c.b16 %v981, %v974
    %v1381 = vpack.c.b16 %v982, %v975
    %v1382 = vpack.c.b16 %v983, %v976
    %v1383 = vpack.c.b16 %v991, %v984
    %v1384 = vpack.c.b16 %v992, %v985
    %v1385 = vpack.c.b16 %v993, %v986
    %v1386 = vpack.c.b16 %v994, %v987
    %v1387 = vpack.c.b16 %v995, %v988
    %v1388 = vpack.c.b16 %v996, %v989
    %v1389 = vpack.c.b16 %v997, %v990
    %v1390 = vpack.c.b16 %v1005, %v998
    %v1391 = vpack.c.b16 %v1006, %v999
    %v1392 = vpack.c.b16 %v1007, %v1000
    %v1393 = vpack.c.b16 %v1008, %v1001
    %v1394 = vpack.c.b16 %v1009, %v1002
    %v1395 = vpack.c.b16 %v1010, %v1003
    %v1396 = vpack.c.b16 %v1011, %v1004
    %v1397 = vpack.c.b16 %v1019, %v1012
    %v1398 = vpack.c.b16 %v1020, %v1013
    %v1399 = vpack.c.b16 %v1021, %v1014
    %v1400 = vpack.c.b16 %v1022, %v1015
    %v1401 = vpack.c.b16 %v1023, %v1016
    %v1402 = vpack.c.b16 %v1024, %v1017
    %v1403 = vpack.c.b16 %v1025, %v1018
    %v1404 = vpack.c.b16 %v1033, %v1026
    %v1405 = vpack.c.b16 %v1034, %v1027
    %v1406 = vpack.c.b16 %v1035, %v1028
    %v1407 = vpack.c.b16 %v1036, %v1029
    %v1408 = vpack.c.b16 %v1037, %v1030
    %v1409 = vpack.c.b16 %v1038, %v1031
    %v1410 = vpack.c.b16 %v1039, %v1032
    %v1411 = vpack.c.b16 %v1047, %v1040
    %v1412 = vpack.c.b16 %v1048, %v1041
    %v1413 = vpack.c.b16 %v1049, %v1042
    %v1414 = vpack.c.b16 %v1050, %v1043
    %v1415 = vpack.c.b16 %v1051, %v1044
    %v1416 = vpack.c.b16 %v1052, %v1045
    %v1417 = vpack.c.b16 %v1053, %v1046
    %v1418 = vpack.c.b16 %v1061, %v1054
    %v1419 = vpack.c.b16 %v1062, %v1055
    %v1420 = vpack.c.b16 %v1063, %v1056
    %v1421 = vpack.c.b16 %v1064, %v1057
    %v1422 = vpack.c.b16 %v1065, %v1058
    %v1423 = vpack.c.b16 %v1066, %v1059
    %v1424 = vpack.c.b16 %v1067, %v1060
    %v1425 = vpack.c.b16 %v1075, %v1068
    %v1426 = vpack.c.b16 %v1076, %v1069
    %v1427 = vpack.c.b16 %v1077, %v1070
    %v1428 = vpack.c.b16 %v1078, %v1071
    %v1429 = vpack.c.b16 %v1079, %v1072
    %v1430 = vpack.c.b16 %v1080, %v1073
    %v1431 = vpack.c.b16 %v1081, %v1074
    %v1432 = vpack.c.b16 %v1089, %v1082
    %v1433 = vpack.c.b16 %v1090, %v1083
    %v1434 = vpack.c.b16 %v1091, %v1084
    %v1435 = vpack.c.b16 %v1092, %v1085
    %v1436 = vpack.c.b16 %v1093, %v1086
    %v1437 = vpack.c.b16 %v1094, %v1087
    %v1438 = vpack.c.b16 %v1095, %v1088
    %v1439 = vpack.c.b16 %v1103, %v1096
    %v1440 = vpack.c.b16 %v1104, %v1097
    %v1441 = vpack.c.b16 %v1105, %v1098
    %v1442 = vpack.c.b16 %v1106, %v1099
    %v1443 = vpack.c.b16 %v1107, %v1100
    %v1444 = vpack.c.b16 %v1108, %v1101
    %v1445 = vpack.c.b16 %v1109, %v1102
    %v1446 = vpack.c.b16 %v1117, %v1110
    %v1447 = vpack.c.b16 %v1118, %v1111
    %v1448 = vpack.c.b16 %v1119, %v1112
    %v1449 = vpack.c.b16 %v1120, %v1113
    %v1450 = vpack.c.b16 %v1121, %v1114
    %v1451 = vpack.c.b16 %v1122, %v1115
    %v1452 = vpack.c.b16 %v1123, %v1116
    %v1453 = vpack.c.b16 %v1131, %v1124
    %v1454 = vpack.c.b16 %v1132, %v1125
    %v1455 = vpack.c.b16 %v1133, %v1126
    %v1456 = vpack.c.b16 %v1134, %v1127
    %v1457 = vpack.c.b16 %v1135, %v1128
    %v1458 = vpack.c.b16 %v1136, %v1129
    %v1459 = vpack.c.b16 %v1137, %v1130
    %v1460 = vpack.c.b16 %v1145, %v1138
    %v1461 = vpack.c.b16 %v1146, %v1139
    %v1462 = vpack.c.b16 %v1147, %v1140
    %v1463 = vpack.c.b16 %v1148, %v1141
    %v1464 = vpack.c.b16 %v1149, %v1142
    %v1465 = vpack.c.b16 %v1150, %v1143
    %v1466 = vpack.c.b16 %v1151, %v1144
    %v1467 = vpack.c.b16 %v1159, %v1152
    %v1468 = vpack.c.b16 %v1160, %v1153
    %v1469 = vpack.c.b16 %v1161, %v1154
    %v1470 = vpack.c.b16 %v1162, %v1155
    %v1471 = vpack.c.b16 %v1163, %v1156
    %v1472 = vpack.c.b16 %v1164, %v1157
    %v1473 = vpack.c.b16 %v1165, %v1158
    %v1474 = vpack.c.b16 %v1173, %v1166
    %v1475 = vpack.c.b16 %v1174, %v1167
    %v1476 = vpack.c.b16 %v1175, %v1168
    %v1477 = vpack.c.b16 %v1176, %v1169
    %v1478 = vpack.c.b16 %v1177, %v1170
    %v1479 = vpack.c.b16 %v1178, %v1171
    %v1480 = vpack.c.b16 %v1179, %v1172
    %v1481 = vpack.c.b16 %v1187, %v1180
    %v1482 = vpack.c.b16 %v1188, %v1181
    %v1483 = vpack.c.b16 %v1189, %v1182
    %v1484 = vpack.c.b16 %v1190, %v1183
    %v1485 = vpack.c.b16 %v1191, %v1184
    %v1486 = vpack.c.b16 %v1192, %v1185
    %v1487 = vpack.c.b16 %v1193, %v1186
    %v1488 = vpack.c.b16 %v1201, %v1194
    %v1489 = vpack.c.b16 %v1202, %v1195
    %v1490 = vpack.c.b16 %v1203, %v1196
    %v1491 = vpack.c.b16 %v1204, %v1197
    %v1492 = vpack.c.b16 %v1205, %v1198
    %v1493 = vpack.c.b16 %v1206, %v1199
    %v1494 = vpack.c.b16 %v1207, %v1200
    %v1495 = vpack.c.b16 %v1215, %v1208
    %v1496 = vpack.c.b16 %v1216, %v1209
    %v1497 = vpack.c.b16 %v1217, %v1210
    %v1498 = vpack.c.b16 %v1218, %v1211
    %v1499 = vpack.c.b16 %v1219, %v1212
    %v1500 = vpack.c.b16 %v1220, %v1213
    %v1501 = vpack.c.b16 %v1221, %v1214
    %v1502 = vpack.c.b16 %v1229, %v1222
    %v1503 = vpack.c.b16 %v1230, %v1223
    %v1504 = vpack.c.b16 %v1231, %v1224
    %v1505 = vpack.c.b16 %v1232, %v1225
    %v1506 = vpack.c.b16 %v1233, %v1226
    %v1507 = vpack.c.b16 %v1234, %v1227
    %v1508 = vpack.c.b16 %v1235, %v1228
    %v1509 = vpack.c.b16 %v1243, %v1236
    %v1510 = vpack.c.b16 %v1244, %v1237
    %v1511 = vpack.c.b16 %v1245, %v1238
    %v1512 = vpack.c.b16 %v1246, %v1239
    %v1513 = vpack.c.b16 %v1247, %v1240
    %v1514 = vpack.c.b16 %v1248, %v1241
    %v1515 = vpack.c.b16 %v1249, %v1242
    %v1516 = vpack.c.b16 %v1257, %v1250
    %v1517 = vpack.c.b16 %v1258, %v1251
    %v1518 = vpack.c.b16 %v1259, %v1252
    %v1519 = vpack.c.b16 %v1260, %v1253
    %v1520 = vpack.c.b16 %v1261, %v1254
    %v1521 = vpack.c.b16 %v1262, %v1255
    %v1522 = vpack.c.b16 %v1263, %v1256
    %v1523 = vpack.c.b16 %v1271, %v1264
    %v1524 = vpack.c.b16 %v1272, %v1265
    %v1525 = vpack.c.b16 %v1273, %v1266
    %v1526 = vpack.c.b16 %v1274, %v1267
    %v1527 = vpack.c.b16 %v1275, %v1268
    %v1528 = vpack.c.b16 %v1276, %v1269
    %v1529 = vpack.c.b16 %v1277, %v1270
    %v1530 = vpack.c.b16 %v1285, %v1278
    %v1531 = vpack.c.b16 %v1286, %v1279
    %v1532 = vpack.c.b16 %v1287, %v1280
    %v1533 = vpack.c.b16 %v1288, %v1281
    %v1534 = vpack.c.b16 %v1289, %v1282
    %v1535 = vpack.c.b16 %v1290, %v1283
    %v1536 = vpack.c.b16 %v1291, %v1284
    %v1537 = vpack.c.b16 %v1299, %v1292
    %v1538 = vpack.c.b16 %v1300, %v1293
    %v1539 = vpack.c.b16 %v1301, %v1294
    %v1540 = vpack.c.b16 %v1302, %v1295
    %v1541 = vpack.c.b16 %v1303, %v1296
    %v1542 = vpack.c.b16 %v1304, %v1297
    %v1543 = vpack.c.b16 %v1305, %v1298
    %v1544 = vpack.c.b16 %v1313, %v1306
    %v1545 = vpack.c.b16 %v1314, %v1307
    %v1546 = vpack.c.b16 %v1315, %v1308
    %v1547 = vpack.c.b16 %v1316, %v1309
    %v1548 = vpack.c.b16 %v1317, %v1310
    %v1549 = vpack.c.b16 %v1318, %v1311
    %v1550 = vpack.c.b16 %v1319, %v1312
    %v1551 = vpack.c.b16 %v1327, %v1320
    %v1552 = vpack.c.b16 %v1328, %v1321
    %v1553 = vpack.c.b16 %v1329, %v1322
    %v1554 = vpack.c.b16 %v1330, %v1323
    %v1555 = vpack.c.b16 %v1331, %v1324
    %v1556 = vpack.c.b16 %v1332, %v1325
    %v1557 = vpack.c.b16 %v1333, %v1326
    %1782 = vmatprep.subr.bf16.mxu0 %v1335
    %1783 = vmatpush1.bf16.msra.mxu0 %v1334
    %1784 = vmatprep.subr.bf16.mxu0 %v1342
    %1785 = vmatpush1.bf16.msra.mxu0 %v1341
    %1786 = vmatprep.subr.bf16.mxu0 %v1349
    %1787 = vmatpush1.bf16.msra.mxu0 %v1348
    %1788 = vmatprep.subr.bf16.mxu0 %v1356
    %1789 = vmatpush1.bf16.msra.mxu0 %v1355
    %1790 = vmatprep.subr.bf16.mxu0 %v1363
    %1791 = vmatpush1.bf16.msra.mxu0 %v1362
    %1792 = vmatprep.subr.bf16.mxu0 %v1370
    %1793 = vmatpush1.bf16.msra.mxu0 %v1369
    %1794 = vmatprep.subr.bf16.mxu0 %v1377
    %1795 = vmatpush1.bf16.msra.mxu0 %v1376
    %1796 = vmatprep.subr.bf16.mxu0 %v1384
    %1797 = vmatpush1.bf16.msra.mxu0 %v1383
    %1798 = vmatprep.subr.bf16.mxu0 %v1391
    %1799 = vmatpush1.bf16.msra.mxu0 %v1390
    %1800 = vmatprep.subr.bf16.mxu0 %v1398
    %1801 = vmatpush1.bf16.msra.mxu0 %v1397
    %1802 = vmatprep.subr.bf16.mxu0 %v1405
    %1803 = vmatpush1.bf16.msra.mxu0 %v1404
    %1804 = vmatprep.subr.bf16.mxu0 %v1412
    %1805 = vmatpush1.bf16.msra.mxu0 %v1411
    %1806 = vmatprep.subr.bf16.mxu0 %v1419
    %1807 = vmatpush1.bf16.msra.mxu0 %v1418
    %1808 = vmatprep.subr.bf16.mxu0 %v1426
    %1809 = vmatpush1.bf16.msra.mxu0 %v1425
    %1810 = vmatprep.subr.bf16.mxu0 %v1433
    %1811 = vmatpush1.bf16.msra.mxu0 %v1432
    %1812 = vmatprep.subr.bf16.mxu0 %v1440
    %1813 = vmatpush1.bf16.msra.mxu0 %v1439
    %1814 = vmatprep.mubr.bf16.mxu0 %v334
    %1815 = vmatmul.mubr.bf16.gmra.mrb[0].mxu0 %v333
    %v1816 = vpop.f32.mrb[0].mxu0
    %v1817 = vadd.f32 %v598, %v1816
    %v1818 = vpop.f32.mrb[0].mxu0
    %v1819 = vadd.f32 %v602, %v1818
    %v1820 = vpop.f32.mrb[0].mxu0
    %v1821 = vadd.f32 %v598, %v1820
    %v1822 = vpop.f32.mrb[0].mxu0
    %v1823 = vadd.f32 %v602, %v1822
    %1824 = vdwg.mxu0
    %1825 = vmatprep.subr.bf16.mxu0 %v1447
    %1826 = vmatpush1.bf16.msra.mxu0 %v1446
    %1827 = vmatprep.subr.bf16.mxu0 %v1454
    %1828 = vmatpush1.bf16.msra.mxu0 %v1453
    %1829 = vmatprep.subr.bf16.mxu0 %v1461
    %1830 = vmatpush1.bf16.msra.mxu0 %v1460
    %1831 = vmatprep.subr.bf16.mxu0 %v1468
    %1832 = vmatpush1.bf16.msra.mxu0 %v1467
    %1833 = vmatprep.subr.bf16.mxu0 %v1475
    %1834 = vmatpush1.bf16.msra.mxu0 %v1474
    %1835 = vmatprep.subr.bf16.mxu0 %v1482
    %1836 = vmatpush1.bf16.msra.mxu0 %v1481
    %1837 = vmatprep.subr.bf16.mxu0 %v1489
    %1838 = vmatpush1.bf16.msra.mxu0 %v1488
    %1839 = vmatprep.subr.bf16.mxu0 %v1496
    %1840 = vmatpush1.bf16.msra.mxu0 %v1495
    %1841 = vmatprep.subr.bf16.mxu0 %v1503
    %1842 = vmatpush1.bf16.msra.mxu0 %v1502
    %1843 = vmatprep.subr.bf16.mxu0 %v1510
    %1844 = vmatpush1.bf16.msra.mxu0 %v1509
    %1845 = vmatprep.subr.bf16.mxu0 %v1517
    %1846 = vmatpush1.bf16.msra.mxu0 %v1516
    %1847 = vmatprep.subr.bf16.mxu0 %v1524
    %1848 = vmatpush1.bf16.msra.mxu0 %v1523
    %1849 = vmatprep.subr.bf16.mxu0 %v1531
    %1850 = vmatpush1.bf16.msra.mxu0 %v1530
    %1851 = vmatprep.subr.bf16.mxu0 %v1538
    %1852 = vmatpush1.bf16.msra.mxu0 %v1537
    %1853 = vmatprep.subr.bf16.mxu0 %v1545
    %1854 = vmatpush1.bf16.msra.mxu0 %v1544
    %1855 = vmatprep.subr.bf16.mxu0 %v1552
    %1856 = vmatpush1.bf16.msra.mxu0 %v1551
    %1857 = vmatprep.mubr.bf16.mxu0 %v336
    %1858 = vmatmul.mubr.bf16.gmra.mrb[0].mxu0 %v335
    %v1859 = vpop.f32.mrb[0].mxu0
    %v1860 = vadd.f32 %v1817, %v1859
    %v1861 = vpop.f32.mrb[0].mxu0
    %v1862 = vadd.f32 %v1819, %v1861
    %v1863 = vpop.f32.mrb[0].mxu0
    %v1864 = vadd.f32 %v1821, %v1863
    %v1865 = vpop.f32.mrb[0].mxu0
    %v1866 = vadd.f32 %v1823, %v1865
    %1867 = vdwg.mxu0
    %1868 = vmatprep.subr.bf16.mxu0 %v1337
    %1869 = vmatpush1.bf16.msra.mxu0 %v1336
    %1870 = vmatprep.subr.bf16.mxu0 %v1344
    %1871 = vmatpush1.bf16.msra.mxu0 %v1343
    %1872 = vmatprep.subr.bf16.mxu0 %v1351
    %1873 = vmatpush1.bf16.msra.mxu0 %v1350
    %1874 = vmatprep.subr.bf16.mxu0 %v1358
    %1875 = vmatpush1.bf16.msra.mxu0 %v1357
    %1876 = vmatprep.subr.bf16.mxu0 %v1365
    %1877 = vmatpush1.bf16.msra.mxu0 %v1364
    %1878 = vmatprep.subr.bf16.mxu0 %v1372
    %1879 = vmatpush1.bf16.msra.mxu0 %v1371
    %1880 = vmatprep.subr.bf16.mxu0 %v1379
    %1881 = vmatpush1.bf16.msra.mxu0 %v1378
    %1882 = vmatprep.subr.bf16.mxu0 %v1386
    %1883 = vmatpush1.bf16.msra.mxu0 %v1385
    %1884 = vmatprep.subr.bf16.mxu0 %v1393
    %1885 = vmatpush1.bf16.msra.mxu0 %v1392
    %1886 = vmatprep.subr.bf16.mxu0 %v1400
    %1887 = vmatpush1.bf16.msra.mxu0 %v1399
    %1888 = vmatprep.subr.bf16.mxu0 %v1407
    %1889 = vmatpush1.bf16.msra.mxu0 %v1406
    %1890 = vmatprep.subr.bf16.mxu0 %v1414
    %1891 = vmatpush1.bf16.msra.mxu0 %v1413
    %1892 = vmatprep.subr.bf16.mxu0 %v1421
    %1893 = vmatpush1.bf16.msra.mxu0 %v1420
    %1894 = vmatprep.subr.bf16.mxu0 %v1428
    %1895 = vmatpush1.bf16.msra.mxu0 %v1427
    %1896 = vmatprep.subr.bf16.mxu0 %v1435
    %1897 = vmatpush1.bf16.msra.mxu0 %v1434
    %1898 = vmatprep.subr.bf16.mxu0 %v1442
    %1899 = vmatpush1.bf16.msra.mxu0 %v1441
    %1900 = vmatprep.mubr.bf16.mxu0 %v334
    %1901 = vmatmul.mubr.bf16.gmra.mrb[0].mxu0 %v333
    %v1902 = vpop.f32.mrb[0].mxu0
    %v1903 = vadd.f32 %v606, %v1902
    %v1904 = vpop.f32.mrb[0].mxu0
    %v1905 = vadd.f32 %v610, %v1904
    %v1906 = vpop.f32.mrb[0].mxu0
    %v1907 = vadd.f32 %v606, %v1906
    %v1908 = vpop.f32.mrb[0].mxu0
    %v1909 = vadd.f32 %v610, %v1908
    %1910 = vdwg.mxu0
    %1911 = vmatprep.subr.bf16.mxu0 %v1449
    %1912 = vmatpush1.bf16.msra.mxu0 %v1448
    %1913 = vmatprep.subr.bf16.mxu0 %v1456
    %1914 = vmatpush1.bf16.msra.mxu0 %v1455
    %1915 = vmatprep.subr.bf16.mxu0 %v1463
    %1916 = vmatpush1.bf16.msra.mxu0 %v1462
    %1917 = vmatprep.subr.bf16.mxu0 %v1470
    %1918 = vmatpush1.bf16.msra.mxu0 %v1469
    %1919 = vmatprep.subr.bf16.mxu0 %v1477
    %1920 = vmatpush1.bf16.msra.mxu0 %v1476
    %1921 = vmatprep.subr.bf16.mxu0 %v1484
    %1922 = vmatpush1.bf16.msra.mxu0 %v1483
    %1923 = vmatprep.subr.bf16.mxu0 %v1491
    %1924 = vmatpush1.bf16.msra.mxu0 %v1490
    %1925 = vmatprep.subr.bf16.mxu0 %v1498
    %1926 = vmatpush1.bf16.msra.mxu0 %v1497
    %1927 = vmatprep.subr.bf16.mxu0 %v1505
    %1928 = vmatpush1.bf16.msra.mxu0 %v1504
    %1929 = vmatprep.subr.bf16.mxu0 %v1512
    %1930 = vmatpush1.bf16.msra.mxu0 %v1511
    %1931 = vmatprep.subr.bf16.mxu0 %v1519
    %1932 = vmatpush1.bf16.msra.mxu0 %v1518
    %1933 = vmatprep.subr.bf16.mxu0 %v1526
    %1934 = vmatpush1.bf16.msra.mxu0 %v1525
    %1935 = vmatprep.subr.bf16.mxu0 %v1533
    %1936 = vmatpush1.bf16.msra.mxu0 %v1532
    %1937 = vmatprep.subr.bf16.mxu0 %v1540
    %1938 = vmatpush1.bf16.msra.mxu0 %v1539
    %1939 = vmatprep.subr.bf16.mxu0 %v1547
    %1940 = vmatpush1.bf16.msra.mxu0 %v1546
    %1941 = vmatprep.subr.bf16.mxu0 %v1554
    %1942 = vmatpush1.bf16.msra.mxu0 %v1553
    %1943 = vmatprep.mubr.bf16.mxu0 %v336
    %1944 = vmatmul.mubr.bf16.gmra.mrb[0].mxu0 %v335
    %v1945 = vpop.f32.mrb[0].mxu0
    %v1946 = vadd.f32 %v1903, %v1945
    %v1947 = vpop.f32.mrb[0].mxu0
    %v1948 = vadd.f32 %v1905, %v1947
    %v1949 = vpop.f32.mrb[0].mxu0
    %v1950 = vadd.f32 %v1907, %v1949
    %v1951 = vpop.f32.mrb[0].mxu0
    %v1952 = vadd.f32 %v1909, %v1951
    %1953 = vdwg.mxu0
    %1954 = vmatprep.subr.bf16.mxu0 %v1339
    %1955 = vmatpush1.bf16.msra.mxu0 %v1338
    %1956 = vmatprep.subr.bf16.mxu0 %v1346
    %1957 = vmatpush1.bf16.msra.mxu0 %v1345
    %1958 = vmatprep.subr.bf16.mxu0 %v1353
    %1959 = vmatpush1.bf16.msra.mxu0 %v1352
    %1960 = vmatprep.subr.bf16.mxu0 %v1360
    %1961 = vmatpush1.bf16.msra.mxu0 %v1359
    %1962 = vmatprep.subr.bf16.mxu0 %v1367
    %1963 = vmatpush1.bf16.msra.mxu0 %v1366
    %1964 = vmatprep.subr.bf16.mxu0 %v1374
    %1965 = vmatpush1.bf16.msra.mxu0 %v1373
    %1966 = vmatprep.subr.bf16.mxu0 %v1381
    %1967 = vmatpush1.bf16.msra.mxu0 %v1380
    %1968 = vmatprep.subr.bf16.mxu0 %v1388
    %1969 = vmatpush1.bf16.msra.mxu0 %v1387
    %1970 = vmatprep.subr.bf16.mxu0 %v1395
    %1971 = vmatpush1.bf16.msra.mxu0 %v1394
    %1972 = vmatprep.subr.bf16.mxu0 %v1402
    %1973 = vmatpush1.bf16.msra.mxu0 %v1401
    %1974 = vmatprep.subr.bf16.mxu0 %v1409
    %1975 = vmatpush1.bf16.msra.mxu0 %v1408
    %1976 = vmatprep.subr.bf16.mxu0 %v1416
    %1977 = vmatpush1.bf16.msra.mxu0 %v1415
    %1978 = vmatprep.subr.bf16.mxu0 %v1423
    %1979 = vmatpush1.bf16.msra.mxu0 %v1422
    %1980 = vmatprep.subr.bf16.mxu0 %v1430
    %1981 = vmatpush1.bf16.msra.mxu0 %v1429
    %1982 = vmatprep.subr.bf16.mxu0 %v1437
    %1983 = vmatpush1.bf16.msra.mxu0 %v1436
    %1984 = vmatprep.subr.bf16.mxu0 %v1444
    %1985 = vmatpush1.bf16.msra.mxu0 %v1443
    %1986 = vmatprep.mubr.bf16.mxu0 %v334
    %1987 = vmatmul.mubr.bf16.gmra.mrb[0].mxu0 %v333
    %v1988 = vpop.f32.mrb[0].mxu0
    %v1989 = vadd.f32 %v614, %v1988
    %v1990 = vpop.f32.mrb[0].mxu0
    %v1991 = vadd.f32 %v618, %v1990
    %v1992 = vpop.f32.mrb[0].mxu0
    %v1993 = vadd.f32 %v614, %v1992
    %v1994 = vpop.f32.mrb[0].mxu0
    %v1995 = vadd.f32 %v618, %v1994
    %1996 = vdwg.mxu0
    %1997 = vmatprep.subr.bf16.mxu0 %v1451
    %1998 = vmatpush1.bf16.msra.mxu0 %v1450
    %1999 = vmatprep.subr.bf16.mxu0 %v1458
    %2000 = vmatpush1.bf16.msra.mxu0 %v1457
    %2001 = vmatprep.subr.bf16.mxu0 %v1465
    %2002 = vmatpush1.bf16.msra.mxu0 %v1464
    %2003 = vmatprep.subr.bf16.mxu0 %v1472
    %2004 = vmatpush1.bf16.msra.mxu0 %v1471
    %2005 = vmatprep.subr.bf16.mxu0 %v1479
    %2006 = vmatpush1.bf16.msra.mxu0 %v1478
    %2007 = vmatprep.subr.bf16.mxu0 %v1486
    %2008 = vmatpush1.bf16.msra.mxu0 %v1485
    %2009 = vmatprep.subr.bf16.mxu0 %v1493
    %2010 = vmatpush1.bf16.msra.mxu0 %v1492
    %2011 = vmatprep.subr.bf16.mxu0 %v1500
    %2012 = vmatpush1.bf16.msra.mxu0 %v1499
    %2013 = vmatprep.subr.bf16.mxu0 %v1507
    %2014 = vmatpush1.bf16.msra.mxu0 %v1506
    %2015 = vmatprep.subr.bf16.mxu0 %v1514
    %2016 = vmatpush1.bf16.msra.mxu0 %v1513
    %2017 = vmatprep.subr.bf16.mxu0 %v1521
    %2018 = vmatpush1.bf16.msra.mxu0 %v1520
    %2019 = vmatprep.subr.bf16.mxu0 %v1528
    %2020 = vmatpush1.bf16.msra.mxu0 %v1527
    %2021 = vmatprep.subr.bf16.mxu0 %v1535
    %2022 = vmatpush1.bf16.msra.mxu0 %v1534
    %2023 = vmatprep.subr.bf16.mxu0 %v1542
    %2024 = vmatpush1.bf16.msra.mxu0 %v1541
    %2025 = vmatprep.subr.bf16.mxu0 %v1549
    %2026 = vmatpush1.bf16.msra.mxu0 %v1548
    %2027 = vmatprep.subr.bf16.mxu0 %v1556
    %2028 = vmatpush1.bf16.msra.mxu0 %v1555
    %2029 = vmatprep.mubr.bf16.mxu0 %v336
    %2030 = vmatmul.mubr.bf16.gmra.mrb[0].mxu0 %v335
    %v2031 = vpop.f32.mrb[0].mxu0
    %v2032 = vadd.f32 %v1989, %v2031
    %v2033 = vpop.f32.mrb[0].mxu0
    %v2034 = vadd.f32 %v1991, %v2033
    %v2035 = vpop.f32.mrb[0].mxu0
    %v2036 = vadd.f32 %v1993, %v2035
    %v2037 = vpop.f32.mrb[0].mxu0
    %v2038 = vadd.f32 %v1995, %v2037
    %2039 = vdwg.mxu0
    %2040 = vmatprep.subr.bf16.mxu0 0
    %2041 = vmatpush1.bf16.msra.mxu0 %v1340
    %2042 = vmatprep.subr.bf16.mxu0 0
    %2043 = vmatpush1.bf16.msra.mxu0 %v1347
    %2044 = vmatprep.subr.bf16.mxu0 0
    %2045 = vmatpush1.bf16.msra.mxu0 %v1354
    %2046 = vmatprep.subr.bf16.mxu0 0
    %2047 = vmatpush1.bf16.msra.mxu0 %v1361
    %2048 = vmatprep.subr.bf16.mxu0 0
    %2049 = vmatpush1.bf16.msra.mxu0 %v1368
    %2050 = vmatprep.subr.bf16.mxu0 0
    %2051 = vmatpush1.bf16.msra.mxu0 %v1375
    %2052 = vmatprep.subr.bf16.mxu0 0
    %2053 = vmatpush1.bf16.msra.mxu0 %v1382
    %2054 = vmatprep.subr.bf16.mxu0 0
    %2055 = vmatpush1.bf16.msra.mxu0 %v1389
    %2056 = vmatprep.subr.bf16.mxu0 0
    %2057 = vmatpush1.bf16.msra.mxu0 %v1396
    %2058 = vmatprep.subr.bf16.mxu0 0
    %2059 = vmatpush1.bf16.msra.mxu0 %v1403
    %2060 = vmatprep.subr.bf16.mxu0 0
    %2061 = vmatpush1.bf16.msra.mxu0 %v1410
    %2062 = vmatprep.subr.bf16.mxu0 0
    %2063 = vmatpush1.bf16.msra.mxu0 %v1417
    %2064 = vmatprep.subr.bf16.mxu0 0
    %2065 = vmatpush1.bf16.msra.mxu0 %v1424
    %2066 = vmatprep.subr.bf16.mxu0 0
    %2067 = vmatpush1.bf16.msra.mxu0 %v1431
    %2068 = vmatprep.subr.bf16.mxu0 0
    %2069 = vmatpush1.bf16.msra.mxu0 %v1438
    %2070 = vmatprep.subr.bf16.mxu0 0
    %2071 = vmatpush1.bf16.msra.mxu0 %v1445
    %2072 = vmatprep.mubr.bf16.mxu0 %v334
    %2073 = vmatmul.mubr.bf16.gmra.mrb[0].mxu0 %v333
    %v2074 = vpop.f32.mrb[0].mxu0
    %v2075 = vadd.f32 %v622, %v2074
    %v2076 = vpop.f32.mrb[0].mxu0
    %v2077 = vpop.f32.mrb[0].mxu0
    %v2078 = vadd.f32 %v622, %v2077
    %v2079 = vpop.f32.mrb[0].mxu0
    %2080 = vdwg.mxu0
    %2081 = vmatprep.subr.bf16.mxu0 0
    %2082 = vmatpush1.bf16.msra.mxu0 %v1452
    %2083 = vmatprep.subr.bf16.mxu0 0
    %2084 = vmatpush1.bf16.msra.mxu0 %v1459
    %2085 = vmatprep.subr.bf16.mxu0 0
    %2086 = vmatpush1.bf16.msra.mxu0 %v1466
    %2087 = vmatprep.subr.bf16.mxu0 0
    %2088 = vmatpush1.bf16.msra.mxu0 %v1473
    %2089 = vmatprep.subr.bf16.mxu0 0
    %2090 = vmatpush1.bf16.msra.mxu0 %v1480
    %2091 = vmatprep.subr.bf16.mxu0 0
    %2092 = vmatpush1.bf16.msra.mxu0 %v1487
    %2093 = vmatprep.subr.bf16.mxu0 0
    %2094 = vmatpush1.bf16.msra.mxu0 %v1494
    %2095 = vmatprep.subr.bf16.mxu0 0
    %2096 = vmatpush1.bf16.msra.mxu0 %v1501
    %2097 = vmatprep.subr.bf16.mxu0 0
    %2098 = vmatpush1.bf16.msra.mxu0 %v1508
    %2099 = vmatprep.subr.bf16.mxu0 0
    %2100 = vmatpush1.bf16.msra.mxu0 %v1515
    %2101 = vmatprep.subr.bf16.mxu0 0
    %2102 = vmatpush1.bf16.msra.mxu0 %v1522
    %2103 = vmatprep.subr.bf16.mxu0 0
    %2104 = vmatpush1.bf16.msra.mxu0 %v1529
    %2105 = vmatprep.subr.bf16.mxu0 0
    %2106 = vmatpush1.bf16.msra.mxu0 %v1536
    %2107 = vmatprep.subr.bf16.mxu0 0
    %2108 = vmatpush1.bf16.msra.mxu0 %v1543
    %2109 = vmatprep.subr.bf16.mxu0 0
    %2110 = vmatpush1.bf16.msra.mxu0 %v1550
    %2111 = vmatprep.subr.bf16.mxu0 0
    %2112 = vmatpush1.bf16.msra.mxu0 %v1557
    %2113 = vmatprep.mubr.bf16.mxu0 %v336
    %2114 = vmatmul.mubr.bf16.gmra.mrb[0].mxu0 %v335
    %v2115 = vpop.f32.mrb[0].mxu0
    %v2116 = vadd.f32 %v2075, %v2115
    %v2117 = vpop.f32.mrb[0].mxu0
    %v2118 = vpop.f32.mrb[0].mxu0
    %v2119 = vadd.f32 %v2078, %v2118
    %v2120 = vpop.f32.mrb[0].mxu0
    %2121 = vdwg.mxu0
    %v2122 = vmul.f32 %v1860, 0.5
    %v2123 = vmul.f32 %v1862, 0.5
    %v2124 = vmul.f32 %v1946, 0.5
    %v2125 = vmul.f32 %v1948, 0.5
    %v2126 = vmul.f32 %v2032, 0.5
    %v2127 = vmul.f32 %v2034, 0.5
    %v2128 = vmul.f32 %v2116, 0.5
    %v2129 = vmul.f32 %v1864, 0.5
    %v2130 = vmul.f32 %v1866, 0.5
    %v2131 = vmul.f32 %v1950, 0.5
    %v2132 = vmul.f32 %v1952, 0.5
    %v2133 = vmul.f32 %v2036, 0.5
    %v2134 = vmul.f32 %v2038, 0.5
    %v2135 = vmul.f32 %v2119, 0.5
    %v2136 = vtanh.pop %v2122
    %v2137 = vtanh.pop %v2123
    %v2138 = vtanh.pop %v2124
    %v2139 = vtanh.pop %v2125
    %v2140 = vtanh.pop %v2126
    %v2141 = vtanh.pop %v2127
    %v2142 = vtanh.pop %v2128
    %v2143 = vtanh.pop %v2129
    %v2144 = vtanh.pop %v2130
    %v2145 = vtanh.pop %v2131
    %v2146 = vtanh.pop %v2132
    %v2147 = vtanh.pop %v2133
    %v2148 = vtanh.pop %v2134
    %v2149 = vtanh.pop %v2135
    %v2150 = vmul.f32 %v2136, 0.5
    %v2151 = vmul.f32 %v2137, 0.5
    %v2152 = vmul.f32 %v2138, 0.5
    %v2153 = vmul.f32 %v2139, 0.5
    %v2154 = vmul.f32 %v2140, 0.5
    %v2155 = vmul.f32 %v2141, 0.5
    %v2156 = vmul.f32 %v2142, 0.5
    %v2157 = vmul.f32 %v2143, 0.5
    %v2158 = vmul.f32 %v2144, 0.5
    %v2159 = vmul.f32 %v2145, 0.5
    %v2160 = vmul.f32 %v2146, 0.5
    %v2161 = vmul.f32 %v2147, 0.5
    %v2162 = vmul.f32 %v2148, 0.5
    %v2163 = vmul.f32 %v2149, 0.5
    %v2164 = vadd.f32 %v2150, 0.5
    %v2165 = vadd.f32 %v2151, 0.5
    %v2166 = vadd.f32 %v2152, 0.5
    %v2167 = vadd.f32 %v2153, 0.5
    %v2168 = vadd.f32 %v2154, 0.5
    %v2169 = vadd.f32 %v2155, 0.5
    %v2170 = vadd.f32 %v2156, 0.5
    %v2171 = vadd.f32 %v2157, 0.5
    %v2172 = vadd.f32 %v2158, 0.5
    %v2173 = vadd.f32 %v2159, 0.5
    %v2174 = vadd.f32 %v2160, 0.5
    %v2175 = vadd.f32 %v2161, 0.5
    %v2176 = vadd.f32 %v2162, 0.5
    %v2177 = vadd.f32 %v2163, 0.5
    %2178 = vst [vmem:[#allocation2] sm:$0xff] %v2164
    %2179 = vst [vmem:[#allocation2 + $0x8] sm:$0xff] %v2165
    %2180 = vst [vmem:[#allocation2 + $0x10] sm:$0xff] %v2166
    %2181 = vst [vmem:[#allocation2 + $0x18] sm:$0xff] %v2167
    %2182 = vst [vmem:[#allocation2 + $0x20] sm:$0xff] %v2168
    %2183 = vst [vmem:[#allocation2 + $0x28] sm:$0xff] %v2169
    %vm2184 = vcmask 130048
    %2185 = vst.msk [vmem:[#allocation2 + $0x30] sm:$0xff] %vm2184, %v2170
    %2186 = vst [vmem:[#allocation2 + $0x38] sm:$0xff] %v2171
    %2187 = vst [vmem:[#allocation2 + $0x40] sm:$0xff] %v2172
    %2188 = vst [vmem:[#allocation2 + $0x48] sm:$0xff] %v2173
    %2189 = vst [vmem:[#allocation2 + $0x50] sm:$0xff] %v2174
    %2190 = vst [vmem:[#allocation2 + $0x58] sm:$0xff] %v2175
    %2191 = vst [vmem:[#allocation2 + $0x60] sm:$0xff] %v2176
    %2192 = vst.msk [vmem:[#allocation2 + $0x68] sm:$0xff] %vm2184, %v2177
    // Predicated region
    $region22: #{tpu_custom_call.1} parent=1 // pred_check
      _
    $region23: #{tpu_custom_call.1} parent=1 // pred_check_branch
      %2194 = sbr.rel (0) target = $region25
    $region24: #{tpu_custom_call.1} parent=1 // pred_region
      %s2196 = ssub.s32 1792, 1792
      %2197 = vsyncadd [#allocation3], %s2196
      %s2198 = sshll.u32 [#allocation2], 4
      %s2199 = int_to_ptr.vmem [resolvable:$true] %s2198
      %2204 = dma.vmem_to_hbm [thread:$0]  %s2199, 1792, %s5, [#allocation3], 896, 896, 56
    $region25: #{tpu_custom_call.1} parent=1 // pred_fallthru
      _
    // Predicated region
    $region26: #{tpu_custom_call.1} parent=1 // pred_check
      _
    $region27: #{tpu_custom_call.1} parent=1 // pred_check_branch
      %2206 = sbr.rel (0) target = $region29
    $region28: #{tpu_custom_call.1} parent=1 // pred_region
      %2207 = dma.done [#allocation3], 1792
    $region29: #{tpu_custom_call.1} parent=1 // pred_fallthru
      _
    %2208 = vsyncpa [#allocation3], 1

</llo_original>
